<compile_context>
chip_gen: v7x
topology: tpu7x:2x2x1
jax: 0.10.0
libtpu: 0.0.40
codegen_flags: <defaults>
</compile_context>

<pallas_src>
import functools
import math

import jax
import jax.numpy as jnp
from jax.experimental import pallas as pl
from jax.experimental.pallas import tpu as pltpu


LANE = 128  # TPU lane width


def _round_up(x, m):
    return (x + m - 1) // m * m


def _lcm(a, b):
    return a * b // math.gcd(a, b)


def _tpu_budget():
    """(vmem_limit_bytes, fused_max_nodes) chosen per TPU generation."""
    cap = 128 * 1024 * 1024
    try:
        info = pltpu.get_tpu_info()
        cap = int(getattr(info, "vmem_capacity_bytes", cap)) or cap
    except Exception:
        pass
    if cap >= 96 * 1024 * 1024:
        # v5e / v6e: 128 MiB physical VMEM -> keep graphs up to 4096 nodes on the
        # single-HBM-read fused path.
        return 96 * 1024 * 1024, 4096
    # v7x: 64 MiB physical VMEM, 2 TensorCores.  Lower the fused threshold so mid-size
    # graphs take the tiled path, whose "parallel" row axis shards across both cores.
    return 48 * 1024 * 1024, 1024


def _default_tiles(n128):
    """(TM, TK) for the gridded path: TK as large as possible (long DMA bursts, low
    per-step overhead) without padding N by more than ~25%."""
    tk = LANE
    for cand in (256, 512, 1024, 2048):
        if _round_up(n128, cand) * 4 <= n128 * 5:
            tk = cand
    return min(512, tk), tk


# --------------------------------------------------------------------------------------
# Fused kernel: all 3 layers, A_hat streamed from HBM exactly once (layer 0) and kept
# resident in a VMEM scratch for layers 2-3.  Grid = (layer, source slab).
# --------------------------------------------------------------------------------------
def _gcn_fused_kernel(a_ref, x_ref, wt1_ref, b1_ref, wt2_ref, b2_ref, wt3_ref, b3_ref,
                      o_ref, a_copy_ref, h_ref, acc_ref, *, tk, n_layers):
    l = pl.program_id(0)
    k = pl.program_id(1)
    nk = pl.num_programs(1)

    @pl.when(k == 0)
    def _():
        acc_ref[...] = jnp.zeros_like(acc_ref)

    # Layer 0: stream one A_hat column slab from HBM (pipelined by BlockSpec), keep a
    # resident copy, and fold its contribution into layer 1's aggregation so the A load
    # hides behind MXU work.
    @pl.when(l == 0)
    def _():
        a_slab = a_ref[...]                                       # (N_pad, tk) bf16
        a_copy_ref[k] = a_slab                                    # persist for layers 2..3
        z = jnp.dot(x_ref[...], wt1_ref[...],                     # (tk, F_pad) f32
                    preferred_element_type=jnp.float32)
        acc_ref[...] += jnp.dot(a_slab, z.astype(jnp.bfloat16),
                                preferred_element_type=jnp.float32)

    # Layers 1..: aggregate against the VMEM-resident copy (zero HBM traffic for A).
    @pl.when(l > 0)
    def _():
        wt = jnp.where(l == 1, wt2_ref[...], wt3_ref[...])        # (F_pad, F_pad) bf16
        row0 = pl.multiple_of(k * tk, 128)
        h_slab = h_ref[pl.ds(row0, tk), :]                        # (tk, F_pad) bf16
        z = jnp.dot(h_slab, wt, preferred_element_type=jnp.float32)
        acc_ref[...] += jnp.dot(a_copy_ref[k], z.astype(jnp.bfloat16),
                                preferred_element_type=jnp.float32)

    # End of a layer: bias (+ ReLU) and either hand activations to the next layer or
    # store the final output.
    @pl.when(k == nk - 1)
    def _():
        b = jnp.where(l == 0, b1_ref[...],
                      jnp.where(l == 1, b2_ref[...], b3_ref[...]))
        y = acc_ref[...] + b

        @pl.when(l < n_layers - 1)
        def _():
            h_ref[...] = jnp.maximum(y, 0.0).astype(h_ref.dtype)

        @pl.when(l == n_layers - 1)
        def _():
            o_ref[...] = y.astype(o_ref.dtype)


def _gcn_fused_forward(a_hat, x_pad, padded_params, *, tk, vmem_limit):
    n_pad = a_hat.shape[0]
    f_in_pad = x_pad.shape[1]
    f_pad = padded_params[0][0].shape[1]
    nk = n_pad // tk
    last_k = nk - 1
    (wt1, b1), (wt2, b2), (wt3, b3) = padded_params

    kernel = functools.partial(_gcn_fused_kernel, tk=tk, n_layers=3)

    def const_spec(arr):
        return pl.BlockSpec(arr.shape, lambda l, k: (0, 0))

    # A / X slabs are only re-fetched while l == 0; afterwards the block index stays
    # pinned at the last slab so no further HBM traffic is issued for them.
    a_spec = pl.BlockSpec((n_pad, tk), lambda l, k: (0, jnp.where(l == 0, k, last_k)))
    x_spec = pl.BlockSpec((tk, f_in_pad), lambda l, k: (jnp.where(l == 0, k, last_k), 0))

    return pl.pallas_call(
        kernel,
        out_shape=jax.ShapeDtypeStruct((n_pad, f_pad), jnp.float32),
        grid_spec=pltpu.PrefetchScalarGridSpec(
            num_scalar_prefetch=0,
            grid=(3, nk),
            in_specs=[a_spec, x_spec,
                      const_spec(wt1), const_spec(b1),
                      const_spec(wt2), const_spec(b2),
                      const_spec(wt3), const_spec(b3)],
            out_specs=pl.BlockSpec((n_pad, f_pad), lambda l, k: (0, 0)),
            scratch_shapes=[
                pltpu.VMEM((nk, n_pad, tk), jnp.bfloat16),   # resident copy of A_hat
                pltpu.VMEM((n_pad, f_pad), jnp.bfloat16),    # activations between layers
                pltpu.VMEM((n_pad, f_pad), jnp.float32),     # aggregation accumulator
            ],
        ),
        compiler_params=pltpu.CompilerParams(
            dimension_semantics=("arbitrary", "arbitrary"),
            vmem_limit_bytes=vmem_limit,
        ),
    )(a_hat, x_pad, wt1, b1, wt2, b2, wt3, b3)


# --------------------------------------------------------------------------------------
# Tiled kernel (large graphs): one aggregation layer, grid = (row block i, source block k)
# with asymmetric (TM, TK) A tiles.  Inner body is just acc += A @ Z; the next layer's
# feature transform is fused into the epilogue.
# --------------------------------------------------------------------------------------
def _gcn_agg_kernel(a_ref, z_ref, b_ref, *rest, tk, z_resident, fuse_next):
    if fuse_next:
        wt_next_ref, o_ref, acc_ref = rest
    else:
        o_ref, acc_ref = rest
    k = pl.program_id(1)

    @pl.when(k == 0)
    def _():
        acc_ref[...] = jnp.zeros_like(acc_ref)

    if z_resident:
        row0 = pl.multiple_of(k * tk, 128)
        z = z_ref[pl.ds(row0, tk), :]
    else:
        z = z_ref[...]
    acc_ref[...] += jnp.dot(a_ref[...], z, preferred_element_type=jnp.float32)

    @pl.when(k == pl.num_programs(1) - 1)
    def _():
        y = acc_ref[...] + b_ref[...]
        if fuse_next:
            h = jnp.maximum(y, 0.0).astype(jnp.bfloat16)
            o_ref[...] = jnp.dot(h, wt_next_ref[...],
                                 preferred_element_type=jnp.float32).astype(o_ref.dtype)
        else:
            o_ref[...] = y.astype(o_ref.dtype)


def _gcn_agg_layer(a_hat, z, bias, wt_next, *, tm, tk, vmem_limit):
    n_pad = a_hat.shape[0]
    f = z.shape[1]
    last = wt_next is None
    f_out = f if last else wt_next.shape[1]
    grid = (n_pad // tm, n_pad // tk)

    # Keep Z fully VMEM-resident for the whole layer (fetched once) when it fits the
    # budget; otherwise stream one (tk, f) slab per reduction step.
    z_resident = int(z.size) * z.dtype.itemsize <= vmem_limit // 4
    if z_resident:
        z_spec = pl.BlockSpec((n_pad, f), lambda i, k: (0, 0))
    else:
        z_spec = pl.BlockSpec((tk, f), lambda i, k: (k, 0))

    in_specs = [
        pl.BlockSpec((tm, tk), lambda i, k: (i, k)),   # A_hat tile (only streamed input)
        z_spec,
        pl.BlockSpec((1, f), lambda i, k: (0, 0)),     # bias
    ]
    args = [a_hat, z, bias]
    if not last:
        in_specs.append(pl.BlockSpec((f, f_out), lambda i, k: (0, 0)))
        args.append(wt_next)

    kernel = functools.partial(_gcn_agg_kernel, tk=tk,
                               z_resident=z_resident, fuse_next=not last)
    return pl.pallas_call(
        kernel,
        out_shape=jax.ShapeDtypeStruct((n_pad, f_out),
                                       jnp.float32 if last else jnp.bfloat16),
        grid_spec=pltpu.PrefetchScalarGridSpec(
            num_scalar_prefetch=0,
            grid=grid,
            in_specs=in_specs,
            out_specs=pl.BlockSpec((tm, f_out), lambda i, k: (i, 0)),
            scratch_shapes=[pltpu.VMEM((tm, f), jnp.float32)],
        ),
        compiler_params=pltpu.CompilerParams(
            dimension_semantics=("parallel", "arbitrary"),
            vmem_limit_bytes=vmem_limit,
        ),
    )(*args)


def _gcn_tiled_forward(a_hat, x_pad, padded_params, *, tm, tk, vmem_limit):
    # Initial transform Z_1 = X @ W_1^T: tiny one-shot XLA matmul (not per-tile work);
    # every later transform is fused into the previous layer kernel's epilogue.
    wt1, _ = padded_params[0]
    z = jnp.dot(x_pad, wt1, preferred_element_type=jnp.float32).astype(jnp.bfloat16)

    n_layers = len(padded_params)
    for l in range(n_layers):
        _, b = padded_params[l]
        wt_next = padded_params[l + 1][0] if l < n_layers - 1 else None
        z = _gcn_agg_layer(a_hat, z, b, wt_next, tm=tm, tk=tk, vmem_limit=vmem_limit)
    return z


# --------------------------------------------------------------------------------------
# Graph normalization (plain-JAX glue) + forward
# --------------------------------------------------------------------------------------
def gcn_norm_dense(edge_index, edge_weight, num_nodes, n_pad=None):
    """Dense A_hat = D^-1/2 (A + I) D^-1/2 with A_hat[target, source] (f32), built
    directly at padded size (padded rows/cols stay zero).

    Mirrors torch_geometric gcn_norm / add_remaining_self_loops: non-loop edges kept,
    a self-loop is added for every node (fill 1.0, existing self-loop weight overrides;
    duplicate self-loop edges collapse last-wins), degree at the target index, symmetric
    normalization with inf -> 0.
    """
    if n_pad is None:
        n_pad = num_nodes
    row, col = edge_index[0], edge_index[1]            # row = source, col = target
    is_loop = row == col
    non_loop = (~is_loop).astype(jnp.float32)
    dummy = jnp.where(is_loop, row, num_nodes)         # non-loop edges -> dump slot
    loop_w = jnp.ones((num_nodes + 1,), jnp.float32).at[dummy].set(edge_weight)[:num_nodes]
    ew = edge_weight * non_loop
    loop_idx = jnp.arange(num_nodes, dtype=row.dtype)
    all_row = jnp.concatenate([row, loop_idx])
    all_col = jnp.concatenate([col, loop_idx])
    all_w = jnp.concatenate([ew, loop_w])
    deg = jnp.zeros((num_nodes,), jnp.float32).at[all_col].add(all_w)
    dinv = jnp.where(deg > 0.0, jax.lax.rsqrt(deg), 0.0)
    norm = dinv[all_row] * all_w * dinv[all_col]
    return jnp.zeros((n_pad, n_pad), jnp.float32).at[all_col, all_row].add(norm)


@functools.partial(jax.jit, static_argnames=("force_tiled", "tm", "tk"))
def gcn_weighted_forward(x, edge_index, edge_weight, params, *,
                         force_tiled=False, tm=None, tk=None):
    """Forward of GCN_Weighted: 3 GCNConv layers with ReLU between them."""
    n, in_c = x.shape
    out_c = params[-1][0].shape[0]
    vmem_limit, fused_max = _tpu_budget()

    n128 = _round_up(n, LANE)
    use_fused = (not force_tiled) and (len(params) == 3) and n128 <= fused_max

    if use_fused:
        tk_eff = min(512, n128) if tk is None else tk
        tm_eff = tk_eff
        n_pad = _round_up(n, tk_eff)
    else:
        d_tm, d_tk = _default_tiles(n128)
        tm_eff = d_tm if tm is None else tm
        tk_eff = d_tk if tk is None else tk
        n_pad = _round_up(n, _lcm(tm_eff, tk_eff))

    # Pad every layer's output width to a common 128-lane slab (zeros, so padding flows
    # consistently through all layers and is only sliced off at the very end).
    f_pad = max(LANE, max(_round_up(w.shape[0], LANE) for w, _ in params))
    f_in_pad = _round_up(in_c, LANE)
    padded_params = []
    for l, (w, b) in enumerate(params):                # w: (out_c, in_c) like torch
        oc, ic = w.shape
        ip = f_in_pad if l == 0 else f_pad
        wt = jnp.zeros((ip, f_pad), jnp.float32).at[:ic, :oc].set(w.T).astype(jnp.bfloat16)
        bb = jnp.zeros((1, f_pad), jnp.float32).at[0, :oc].set(b)
        padded_params.append((wt, bb))

    # A_hat scattered directly at padded size (no extra pad copy), single bf16 cast.
    a_hat = gcn_norm_dense(edge_index, edge_weight, n, n_pad).astype(jnp.bfloat16)
    x_pad = jnp.pad(x, ((0, n_pad - n), (0, f_in_pad - in_c))).astype(jnp.bfloat16)

    if use_fused:
        y = _gcn_fused_forward(a_hat, x_pad, padded_params,
                               tk=tk_eff, vmem_limit=vmem_limit)
    else:
        # TODO(synk): for very sparse graphs at scale, a block-sparse aggregation driven
        # by PrefetchScalarGridSpec (per-row block lists) would skip all-zero A blocks.
        y = _gcn_tiled_forward(a_hat, x_pad, padded_params,
                               tm=tm_eff, tk=tk_eff, vmem_limit=vmem_limit)
    return y[:n, :out_c]


# --------------------------------------------------------------------------------------
if __name__ == "__main__":
    key = jax.random.PRNGKey(0)
    num_nodes, num_edges = 4, 10
    in_channels, hidden_channels, out_channels = 8, 16, 4

    kx, ke, kw, kp = jax.random.split(key, 4)
    X = jax.random.normal(kx, (num_nodes, in_channels), jnp.float32)
    edge_index = jax.random.randint(ke, (2, num_edges), 0, num_nodes, dtype=jnp.int32)
    # TODO(synk): the reference script draws edge_weight of shape (E, 5), which is not a
    # valid GCNConv edge_weight; standard per-edge scalar weights (E,) are used here.
    edge_weight = jax.random.uniform(kw, (num_edges,), jnp.float32)

    # Deterministic parameter init (glorot weight, zero bias) per GCNConv layer.
    layer_dims = [(in_channels, hidden_channels),
                  (hidden_channels, hidden_channels),
                  (hidden_channels, out_channels)]
    params = []
    for kk, (fi, fo) in zip(jax.random.split(kp, len(layer_dims)), layer_dims):
        lim = (6.0 / (fi + fo)) ** 0.5
        w = jax.random.uniform(kk, (fo, fi), jnp.float32, -lim, lim)  # (out, in) like torch
        b = jnp.zeros((fo,), jnp.float32)
        params.append((w, b))

    def reference(x, ei, ew, ps):
        a = gcn_norm_dense(ei, ew, x.shape[0])
        h = x
        for i, (w, b) in enumerate(ps):
            h = a @ (h @ w.T) + b[None, :]
            if i < len(ps) - 1:
                h = jnp.maximum(h, 0.0)
        return h

    # 1) Toy graph from the spec -> fused path, single source slab.
    out = gcn_weighted_forward(X, edge_index, edge_weight, params)
    out = jax.block_until_ready(out)
    assert out.shape == (num_nodes, out_channels)
    assert out.dtype == jnp.float32
    ref = reference(X, edge_index, edge_weight, params)
    # bf16 MXU inputs with f32 accumulation -> ~1e-2 relative error; loose tolerance.
    assert jnp.allclose(out, ref, rtol=1e-1, atol=1e-1), float(jnp.max(jnp.abs(out - ref)))

    # 2) Medium graph through the fused path with several source slabs (pipelined A_hat
    #    load overlapped with layer-1 compute, resident copy reused by layers 2-3).
    n2, e2 = 300, 1500
    k1, k2, k3 = jax.random.split(jax.random.PRNGKey(1), 3)
    X2 = jax.random.normal(k1, (n2, in_channels), jnp.float32)
    ei2 = jax.random.randint(k2, (2, e2), 0, n2, dtype=jnp.int32)
    ew2 = jax.random.uniform(k3, (e2,), jnp.float32)
    ref2 = reference(X2, ei2, ew2, params)
    out2 = jax.block_until_ready(gcn_weighted_forward(X2, ei2, ew2, params, tk=128))
    assert out2.shape == (n2, out_channels)
    assert jnp.allclose(out2, ref2, rtol=1e-1, atol=1e-1), float(jnp.max(jnp.abs(out2 - ref2)))

    # 3) Same graph forced through the gridded/pipelined path (multi-block k reduction,
    #    VMEM-resident Z, next-layer transform fused into the epilogue).
    out3 = jax.block_until_ready(
        gcn_weighted_forward(X2, ei2, ew2, params, force_tiled=True, tm=128, tk=128))
    assert out3.shape == (n2, out_channels)
    assert jnp.allclose(out3, ref2, rtol=1e-1, atol=1e-1), float(jnp.max(jnp.abs(out3 - ref2)))

    print("KERNEL_OK")
</pallas_src>

<mosaic_0001>
module attributes {stable_mosaic.version = 11 : i64} {
  func.func @_gcn_fused_kernel(%arg0: i32, %arg1: i32, %arg2: memref<128x128xbf16, #tpu.memory_space<vmem>>, %arg3: memref<128x128xbf16, #tpu.memory_space<vmem>>, %arg4: memref<128x128xbf16, #tpu.memory_space<vmem>>, %arg5: memref<1x128xf32, #tpu.memory_space<vmem>>, %arg6: memref<128x128xbf16, #tpu.memory_space<vmem>>, %arg7: memref<1x128xf32, #tpu.memory_space<vmem>>, %arg8: memref<128x128xbf16, #tpu.memory_space<vmem>>, %arg9: memref<1x128xf32, #tpu.memory_space<vmem>>, %arg10: memref<128x128xf32, #tpu.memory_space<vmem>>, %arg11: memref<1x128x128xbf16, #tpu.memory_space<vmem>>, %arg12: memref<128x128xbf16, #tpu.memory_space<vmem>>, %arg13: memref<128x128xf32, #tpu.memory_space<vmem>>) attributes {dimension_semantics = [#tpu.dimension_semantics<arbitrary>, #tpu.dimension_semantics<arbitrary>], iteration_bounds = array<i64: 3, 1>, scalar_prefetch = 0 : i64, scratch_operands = 3 : i64, tpu.core_type = #tpu.core_type<tc>, window_params = [{transform_indices = @transform_0, window_bounds = array<i64: 128, 128>}, {transform_indices = @transform_1, window_bounds = array<i64: 128, 128>}, {pipeline_mode = #tpu.pipeline_mode<synchronous>, transform_indices = @transform_2, window_bounds = array<i64: 128, 128>}, {pipeline_mode = #tpu.pipeline_mode<synchronous>, transform_indices = @transform_3, window_bounds = array<i64: 1, 128>}, {pipeline_mode = #tpu.pipeline_mode<synchronous>, transform_indices = @transform_4, window_bounds = array<i64: 128, 128>}, {pipeline_mode = #tpu.pipeline_mode<synchronous>, transform_indices = @transform_5, window_bounds = array<i64: 1, 128>}, {pipeline_mode = #tpu.pipeline_mode<synchronous>, transform_indices = @transform_6, window_bounds = array<i64: 128, 128>}, {pipeline_mode = #tpu.pipeline_mode<synchronous>, transform_indices = @transform_7, window_bounds = array<i64: 1, 128>}, {pipeline_mode = #tpu.pipeline_mode<synchronous>, transform_indices = @transform_8, window_bounds = array<i64: 128, 128>}]} {
    %c0_i32 = arith.constant 0 : i32
    %0 = arith.cmpi eq, %arg1, %c0_i32 : i32
    %1 = arith.extui %0 : i1 to i32
    %c0_i32_0 = arith.constant 0 : i32
    %2 = arith.cmpi ne, %1, %c0_i32_0 : i32
    scf.if %2 {
      %cst = arith.constant 0.000000e+00 : f32
      %12 = vector.broadcast %cst : f32 to vector<128x128xf32>
      %c0 = arith.constant 0 : index
      %c0_7 = arith.constant 0 : index
      %13 = vector.load %arg13[%c0, %c0_7] : memref<128x128xf32, #tpu.memory_space<vmem>>, vector<128x128xf32>
      tpu.vector_store %arg13[%c0, %c0_7], %12 {strides = array<i32>} : memref<128x128xf32, #tpu.memory_space<vmem>>, vector<128x128xf32>,
    } else {
    }
    %c0_i32_1 = arith.constant 0 : i32
    %3 = arith.cmpi eq, %arg0, %c0_i32_1 : i32
    %4 = arith.extui %3 : i1 to i32
    %c0_i32_2 = arith.constant 0 : i32
    %5 = arith.cmpi ne, %4, %c0_i32_2 : i32
    scf.if %5 {
      %c0 = arith.constant 0 : index
      %c0_7 = arith.constant 0 : index
      %12 = vector.load %arg2[%c0, %c0_7] : memref<128x128xbf16, #tpu.memory_space<vmem>>, vector<128x128xbf16>
      %13 = arith.index_cast %arg1 : i32 to index
      %c0_8 = arith.constant 0 : index
      %c0_9 = arith.constant 0 : index
      %14 = vector.load %arg11[%13, %c0_8, %c0_9] : memref<1x128x128xbf16, #tpu.memory_space<vmem>>, vector<1x128x128xbf16>
      %15 = vector.shape_cast %14 : vector<1x128x128xbf16> to vector<128x128xbf16>
      %16 = vector.shape_cast %12 : vector<128x128xbf16> to vector<1x128x128xbf16>
      tpu.vector_store %arg11[%13, %c0_8, %c0_9], %16 {strides = array<i32>} : memref<1x128x128xbf16, #tpu.memory_space<vmem>>, vector<1x128x128xbf16>,
      %c0_10 = arith.constant 0 : index
      %c0_11 = arith.constant 0 : index
      %17 = vector.load %arg3[%c0_10, %c0_11] : memref<128x128xbf16, #tpu.memory_space<vmem>>, vector<128x128xbf16>
      %c0_12 = arith.constant 0 : index
      %c0_13 = arith.constant 0 : index
      %18 = vector.load %arg4[%c0_12, %c0_13] : memref<128x128xbf16, #tpu.memory_space<vmem>>, vector<128x128xbf16>
      %cst = arith.constant dense<0.000000e+00> : vector<128x128xf32>
      %19 = tpu.matmul %17, %18, %cst {dimension_numbers = #tpu.dot_dimension_numbers<[1], [0], [0], [1], [0, 0, 1, 1], [], []>} : vector<128x128xbf16>, vector<128x128xbf16>, vector<128x128xf32> -> vector<128x128xf32>
      %c0_14 = arith.constant 0 : index
      %c0_15 = arith.constant 0 : index
      %20 = vector.load %arg13[%c0_14, %c0_15] : memref<128x128xf32, #tpu.memory_space<vmem>>, vector<128x128xf32>
      %21 = arith.truncf %19 : vector<128x128xf32> to vector<128x128xbf16>
      %cst_16 = arith.constant dense<0.000000e+00> : vector<128x128xf32>
      %22 = tpu.matmul %12, %21, %cst_16 {dimension_numbers = #tpu.dot_dimension_numbers<[1], [0], [0], [1], [0, 0, 1, 1], [], []>} : vector<128x128xbf16>, vector<128x128xbf16>, vector<128x128xf32> -> vector<128x128xf32>
      %23 = arith.addf %20, %22 : vector<128x128xf32>
      %c0_17 = arith.constant 0 : index
      %c0_18 = arith.constant 0 : index
      %24 = vector.load %arg13[%c0_17, %c0_18] : memref<128x128xf32, #tpu.memory_space<vmem>>, vector<128x128xf32>
      tpu.vector_store %arg13[%c0_17, %c0_18], %23 {strides = array<i32>} : memref<128x128xf32, #tpu.memory_space<vmem>>, vector<128x128xf32>,
    } else {
    }
    %c0_i32_3 = arith.constant 0 : i32
    %6 = arith.cmpi sgt, %arg0, %c0_i32_3 : i32
    %7 = arith.extui %6 : i1 to i32
    %c0_i32_4 = arith.constant 0 : i32
    %8 = arith.cmpi ne, %7, %c0_i32_4 : i32
    scf.if %8 {
      %c1_i32 = arith.constant 1 : i32
      %12 = arith.cmpi eq, %arg0, %c1_i32 : i32
      %c0 = arith.constant 0 : index
      %c0_7 = arith.constant 0 : index
      %13 = vector.load %arg6[%c0, %c0_7] : memref<128x128xbf16, #tpu.memory_space<vmem>>, vector<128x128xbf16>
      %c0_8 = arith.constant 0 : index
      %c0_9 = arith.constant 0 : index
      %14 = vector.load %arg8[%c0_8, %c0_9] : memref<128x128xbf16, #tpu.memory_space<vmem>>, vector<128x128xbf16>
      %15 = arith.select %12, %13, %14 : vector<128x128xbf16>
      %c128_i32 = arith.constant 128 : i32
      %16 = arith.muli %arg1, %c128_i32 : i32
      %17 = tpu.assume_multiple %16, 128 : i32
      %18 = arith.index_cast %17 : i32 to index
      %c0_10 = arith.constant 0 : index
      %19 = vector.load %arg12[%18, %c0_10] : memref<128x128xbf16, #tpu.memory_space<vmem>>, vector<128x128xbf16>
      %cst = arith.constant dense<0.000000e+00> : vector<128x128xf32>
      %20 = tpu.matmul %19, %15, %cst {dimension_numbers = #tpu.dot_dimension_numbers<[1], [0], [0], [1], [0, 0, 1, 1], [], []>} : vector<128x128xbf16>, vector<128x128xbf16>, vector<128x128xf32> -> vector<128x128xf32>
      %c0_11 = arith.constant 0 : index
      %c0_12 = arith.constant 0 : index
      %21 = vector.load %arg13[%c0_11, %c0_12] : memref<128x128xf32, #tpu.memory_space<vmem>>, vector<128x128xf32>
      %22 = arith.index_cast %arg1 : i32 to index
      %c0_13 = arith.constant 0 : index
      %c0_14 = arith.constant 0 : index
      %23 = vector.load %arg11[%22, %c0_13, %c0_14] : memref<1x128x128xbf16, #tpu.memory_space<vmem>>, vector<1x128x128xbf16>
      %24 = vector.shape_cast %23 : vector<1x128x128xbf16> to vector<128x128xbf16>
      %25 = arith.truncf %20 : vector<128x128xf32> to vector<128x128xbf16>
      %cst_15 = arith.constant dense<0.000000e+00> : vector<128x128xf32>
      %26 = tpu.matmul %24, %25, %cst_15 {dimension_numbers = #tpu.dot_dimension_numbers<[1], [0], [0], [1], [0, 0, 1, 1], [], []>} : vector<128x128xbf16>, vector<128x128xbf16>, vector<128x128xf32> -> vector<128x128xf32>
      %27 = arith.addf %21, %26 : vector<128x128xf32>
      %c0_16 = arith.constant 0 : index
      %c0_17 = arith.constant 0 : index
      %28 = vector.load %arg13[%c0_16, %c0_17] : memref<128x128xf32, #tpu.memory_space<vmem>>, vector<128x128xf32>
      tpu.vector_store %arg13[%c0_16, %c0_17], %27 {strides = array<i32>} : memref<128x128xf32, #tpu.memory_space<vmem>>, vector<128x128xf32>,
    } else {
    }
    %c0_i32_5 = arith.constant 0 : i32
    %9 = arith.cmpi eq, %arg1, %c0_i32_5 : i32
    %10 = arith.extui %9 : i1 to i32
    %c0_i32_6 = arith.constant 0 : i32
    %11 = arith.cmpi ne, %10, %c0_i32_6 : i32
    scf.if %11 {
      %c0_i32_7 = arith.constant 0 : i32
      %12 = arith.cmpi eq, %arg0, %c0_i32_7 : i32
      %c0 = arith.constant 0 : index
      %c0_8 = arith.constant 0 : index
      %13 = vector.load %arg5[%c0, %c0_8] : memref<1x128xf32, #tpu.memory_space<vmem>>, vector<1x128xf32>
      %c1_i32 = arith.constant 1 : i32
      %14 = arith.cmpi eq, %arg0, %c1_i32 : i32
      %c0_9 = arith.constant 0 : index
      %c0_10 = arith.constant 0 : index
      %15 = vector.load %arg7[%c0_9, %c0_10] : memref<1x128xf32, #tpu.memory_space<vmem>>, vector<1x128xf32>
      %c0_11 = arith.constant 0 : index
      %c0_12 = arith.constant 0 : index
      %16 = vector.load %arg9[%c0_11, %c0_12] : memref<1x128xf32, #tpu.memory_space<vmem>>, vector<1x128xf32>
      %17 = arith.select %14, %15, %16 : vector<1x128xf32>
      %18 = arith.select %12, %13, %17 : vector<1x128xf32>
      %c0_13 = arith.constant 0 : index
      %c0_14 = arith.constant 0 : index
      %19 = vector.load %arg13[%c0_13, %c0_14] : memref<128x128xf32, #tpu.memory_space<vmem>>, vector<128x128xf32>
      %20 = vector.broadcast %18 : vector<1x128xf32> to vector<128x128xf32>
      %21 = arith.addf %19, %20 : vector<128x128xf32>
      %c2_i32 = arith.constant 2 : i32
      %22 = arith.cmpi slt, %arg0, %c2_i32 : i32
      %23 = arith.extui %22 : i1 to i32
      %c0_i32_15 = arith.constant 0 : i32
      %24 = arith.cmpi ne, %23, %c0_i32_15 : i32
      scf.if %24 {
        %cst = arith.constant 0.000000e+00 : f32
        %28 = vector.broadcast %cst : f32 to vector<128x128xf32>
        %29 = arith.maximumf %21, %28 : vector<128x128xf32>
        %30 = arith.truncf %29 : vector<128x128xf32> to vector<128x128xbf16>
        %c0_18 = arith.constant 0 : index
        %c0_19 = arith.constant 0 : index
        %31 = vector.load %arg12[%c0_18, %c0_19] : memref<128x128xbf16, #tpu.memory_space<vmem>>, vector<128x128xbf16>
        tpu.vector_store %arg12[%c0_18, %c0_19], %30 {strides = array<i32>} : memref<128x128xbf16, #tpu.memory_space<vmem>>, vector<128x128xbf16>,
      } else {
      }
      %c2_i32_16 = arith.constant 2 : i32
      %25 = arith.cmpi eq, %arg0, %c2_i32_16 : i32
      %26 = arith.extui %25 : i1 to i32
      %c0_i32_17 = arith.constant 0 : i32
      %27 = arith.cmpi ne, %26, %c0_i32_17 : i32
      scf.if %27 {
        %c0_18 = arith.constant 0 : index
        %c0_19 = arith.constant 0 : index
        %28 = vector.load %arg10[%c0_18, %c0_19] : memref<128x128xf32, #tpu.memory_space<vmem>>, vector<128x128xf32>
        tpu.vector_store %arg10[%c0_18, %c0_19], %21 {strides = array<i32>} : memref<128x128xf32, #tpu.memory_space<vmem>>, vector<128x128xf32>,
      } else {
      }
    } else {
    }
    return
  }
  func.func @transform_0(%arg0: i32, %arg1: i32) -> (i32, i32) {
    %c0_i32 = arith.constant 0 : i32
    %0 = arith.cmpi eq, %arg0, %c0_i32 : i32
    %c0_i32_0 = arith.constant 0 : i32
    %1 = arith.select %0, %arg1, %c0_i32_0 : i32
    %c0_i32_1 = arith.constant 0 : i32
    %c0_i32_2 = arith.constant 0 : i32
    return %c0_i32_1, %1 : i32, i32
  }
  func.func @transform_1(%arg0: i32, %arg1: i32) -> (i32, i32) {
    %c0_i32 = arith.constant 0 : i32
    %0 = arith.cmpi eq, %arg0, %c0_i32 : i32
    %c0_i32_0 = arith.constant 0 : i32
    %1 = arith.select %0, %arg1, %c0_i32_0 : i32
    %c0_i32_1 = arith.constant 0 : i32
    %c0_i32_2 = arith.constant 0 : i32
    return %1, %c0_i32_1 : i32, i32
  }
  func.func @transform_2(%arg0: i32, %arg1: i32) -> (i32, i32) {
    %c0_i32 = arith.constant 0 : i32
    %c0_i32_0 = arith.constant 0 : i32
    %c0_i32_1 = arith.constant 0 : i32
    return %c0_i32, %c0_i32_0 : i32, i32
  }
  func.func @transform_3(%arg0: i32, %arg1: i32) -> (i32, i32) {
    %c0_i32 = arith.constant 0 : i32
    %c0_i32_0 = arith.constant 0 : i32
    %c0_i32_1 = arith.constant 0 : i32
    return %c0_i32, %c0_i32_0 : i32, i32
  }
  func.func @transform_4(%arg0: i32, %arg1: i32) -> (i32, i32) {
    %c0_i32 = arith.constant 0 : i32
    %c0_i32_0 = arith.constant 0 : i32
    %c0_i32_1 = arith.constant 0 : i32
    return %c0_i32, %c0_i32_0 : i32, i32
  }
  func.func @transform_5(%arg0: i32, %arg1: i32) -> (i32, i32) {
    %c0_i32 = arith.constant 0 : i32
    %c0_i32_0 = arith.constant 0 : i32
    %c0_i32_1 = arith.constant 0 : i32
    return %c0_i32, %c0_i32_0 : i32, i32
  }
  func.func @transform_6(%arg0: i32, %arg1: i32) -> (i32, i32) {
    %c0_i32 = arith.constant 0 : i32
    %c0_i32_0 = arith.constant 0 : i32
    %c0_i32_1 = arith.constant 0 : i32
    return %c0_i32, %c0_i32_0 : i32, i32
  }
  func.func @transform_7(%arg0: i32, %arg1: i32) -> (i32, i32) {
    %c0_i32 = arith.constant 0 : i32
    %c0_i32_0 = arith.constant 0 : i32
    %c0_i32_1 = arith.constant 0 : i32
    return %c0_i32, %c0_i32_0 : i32, i32
  }
  func.func @transform_8(%arg0: i32, %arg1: i32) -> (i32, i32) {
    %c0_i32 = arith.constant 0 : i32
    %c0_i32_0 = arith.constant 0 : i32
    %c0_i32_1 = arith.constant 0 : i32
    return %c0_i32, %c0_i32_0 : i32, i32
  }
}

</mosaic_0001>

<llo_original>
// kernel: gcn_weighted_forward.1
$region0: #{gcn_weighted_forward.1}
  #allocation0 [shape = 'u32[]', space=smem, size = 0x4, offset = 0x4, fixed_abs, tag = 'smem constant byte address 0x4 - core index']
  #allocation1 [shape = 'u32[144,128]{1,0:T(1,128)}', space=vmem, size = 0x12000, scoped, tag = 'internal scratch']
  #allocation2 [shape = 'bf16[1,128,128]{2,1,0:T(16,128)(2,1)}', space=vmem, size = 0x8000, scoped, tag = 'scratch operand']
  #allocation3 [shape = 'bf16[128,128]{1,0:T(16,128)(2,1)}', space=vmem, size = 0x8000, scoped, tag = 'scratch operand']
  #allocation4 [shape = 'f32[128,128]{1,0:T(8,128)}', space=vmem, size = 0x10000, scoped, tag = 'scratch operand']
  %s0 = inlined_call_operand.hbm [shape: bf16[128,128], index: 0, kind: input, shape index: {}]
  %s1 = inlined_call_operand.hbm [shape: bf16[128,128], index: 1, kind: input, shape index: {}]
  %s2 = inlined_call_operand.hbm [shape: bf16[128,128], index: 2, kind: input, shape index: {}]
  %s3 = inlined_call_operand.hbm [shape: f32[1,128], index: 3, kind: input, shape index: {}]
  %s4 = inlined_call_operand.hbm [shape: bf16[128,128], index: 4, kind: input, shape index: {}]
  %s5 = inlined_call_operand.hbm [shape: f32[1,128], index: 5, kind: input, shape index: {}]
  %s6 = inlined_call_operand.hbm [shape: bf16[128,128], index: 6, kind: input, shape index: {}]
  %s7 = inlined_call_operand.hbm [shape: f32[1,128], index: 7, kind: input, shape index: {}]
  %s8 = inlined_call_operand.hbm [shape: f32[128,128], index: 8, kind: output, shape index: {}]
  %s9 = sld [smem:[#allocation0]]
  $region121: #{gcn_weighted_forward.1} parent=0
    _
  %s11 = ssub.s32 1, %s9
  %s12 = scalar_select 0, %s11, %s9
  $region1: #{gcn_weighted_forward.1} parent=0
    #allocation5 [shape = 'u8[65536]{0}', space=vmem, size = 0x10000, scoped, tag = 'input window, operand 0']
    #allocation6 [shape = 's32[2]{0}', space=sflag, size = 0x8, scoped, tag = 'scoped memory for gcn_weighted_forward.1']
    #allocation7 [shape = 's32[2]{0}', space=sflag, size = 0x8, scoped, tag = 'scoped memory for gcn_weighted_forward.1']
    #allocation8 [shape = 'u8[65536]{0}', space=vmem, size = 0x10000, scoped, tag = 'input window, operand 1']
    #allocation9 [shape = 's32[2]{0}', space=sflag, size = 0x8, scoped, tag = 'scoped memory for gcn_weighted_forward.1']
    #allocation10 [shape = 'u8[32768]{0}', space=vmem, size = 0x8000, scoped, tag = 'input window, operand 2, single buffered']
    #allocation11 [shape = 'u8[512]{0}', space=vmem, size = 0x400, scoped, tag = 'input window, operand 3, single buffered']
    #allocation12 [shape = 's32[1]{0}', space=sflag, size = 0x4, scoped, tag = 'scoped memory for gcn_weighted_forward.1']
    #allocation13 [shape = 'u8[32768]{0}', space=vmem, size = 0x8000, scoped, tag = 'input window, operand 4, single buffered']
    #allocation14 [shape = 'u8[512]{0}', space=vmem, size = 0x400, scoped, tag = 'input window, operand 5, single buffered']
    #allocation15 [shape = 's32[1]{0}', space=sflag, size = 0x4, scoped, tag = 'scoped memory for gcn_weighted_forward.1']
    #allocation16 [shape = 'u8[32768]{0}', space=vmem, size = 0x8000, scoped, tag = 'input window, operand 6, single buffered']
    #allocation17 [shape = 'u8[512]{0}', space=vmem, size = 0x400, scoped, tag = 'input window, operand 7, single buffered']
    #allocation18 [shape = 's32[1]{0}', space=sflag, size = 0x4, scoped, tag = 'scoped memory for gcn_weighted_forward.1']
    #allocation19 [shape = 'u8[65536]{0}', space=vmem, size = 0x10000, scoped, tag = 'output window, operand 0, single buffered']
    %13 = vsyncpa [#allocation6], 0
    %s14 = scalar_lea.sflag [#allocation6], 1
    %15 = vsyncpa %s14, 0
    %16 = vsyncpa [#allocation9], 0
    %s17 = scalar_lea.sflag [#allocation9], 1
    %18 = vsyncpa %s17, 0
    %19 = vsyncpa [#allocation12], 0
    %20 = vsyncpa [#allocation15], 0
    %21 = vsyncpa [#allocation18], 0
    %22 = vsyncpa [#allocation7], 0
    loop: start=0, step=1, limit=5
    $region2: #{gcn_weighted_forward.1} parent=1 // loop_pre_header
      _
    $region3: #{gcn_weighted_forward.1} parent=1 // loop_header
      %s24 = sphi 0, %s28
      %p25 = scmp.ge.s32.totalorder %s24, 5
      %s31 = sphi 0, %s43
      %s32 = sphi 0, %s39
      %s33 = sphi 0, %s31
      %s34 = sphi 0, %s32
      %s35 = sphi 0, %s33
      %s36 = sphi 0, %s34
      %s50 = sphi 0, %s52
      %s53 = sphi 0, %s50
      %s54 = sphi 0, %s53
      %s70 = sphi 0, %s54
      %s80 = sphi 0, %s82
      %s83 = sphi 0, %s80
      %s84 = sphi 0, %s83
      %s100 = sphi 0, %s84
      %s104 = sphi 0, %s104
      %s106 = sphi 0, %s104
      %s107 = sphi 0, %s106
      %s121 = sphi 0, %s107
      %s125 = sphi 0, %s125
      %s127 = sphi 0, %s125
      %s128 = sphi 0, %s127
      %s142 = sphi 0, %s128
      %s146 = sphi 0, %s146
      %s148 = sphi 0, %s146
      %s149 = sphi 0, %s148
      %s163 = sphi 0, %s149
      %s167 = sphi 0, %s167
      %s169 = sphi 0, %s167
      %s170 = sphi 0, %s169
      %s184 = sphi 0, %s170
      %s188 = sphi 0, %s188
      %s190 = sphi 0, %s188
      %s191 = sphi 0, %s190
      %s205 = sphi 0, %s191
      %s209 = sphi 0, %s209
      %s211 = sphi 0, %s209
      %s212 = sphi 0, %s211
      %s226 = sphi 0, %s212
      %s230 = sphi 0, %s230
      %s232 = sphi 0, %s230
      %s233 = sphi 0, %s232
      %s247 = sphi 0, %s233
    $region4: #{gcn_weighted_forward.1} parent=1 // loop_header_branch
      %27 = sbr.rel (%p25) target = $region8
    $region5: #{gcn_weighted_forward.1} parent=1 // loop_body
      %s29 = ssub.s32 %s24, 1
      %s30 = ssub.s32 %s24, 2
      %s37 = sadd.s32 1, %s32
      %p38 = scmp.ge.s32.totalorder %s37, 1
      %s39 = scalar_select %p38, 0, %s37
      %s40 = sadd.s32 1, %s31
      %s41 = scalar_select %p38, %s40, %s31
      %p42 = scmp.ge.s32.totalorder %s41, 3
      %s43 = scalar_select %p42, 0, %s41
      %p44 = scmp.eq.s32.totalorder %s31, 0
      %s45 = scalar_select %p44, %s32, 0
      %p46 = scmp.eq.s32.totalorder %s43, 0
      %s47 = scalar_select %p46, %s39, 0
      %s48 = ssub.s32 %s45, %s47
      %p49 = scmp.eq.s32.totalorder %s48, 0
      %s51 = sadd.s32 %s50, 1
      %s52 = scalar_select %p49, %s50, %s51
      %p55 = pneg %p49
      %p56 = scmp.eq.s32.totalorder %s24, 2
      %p57 = por %p55, %p56
      %p58 = scmp.ne.s32.totalorder %s50, %s53
      %p59 = scmp.eq.s32.totalorder %s24, 0
      %p60 = por %p58, %p59
      %p61 = scmp.ne.s32.totalorder %s50, %s53
      %p62 = scmp.eq.s32.totalorder %s29, 2
      %p63 = por %p61, %p62
      %p64 = scmp.ne.s32.totalorder %s53, %s54
      %p65 = scmp.eq.s32.totalorder %s29, 0
      %p66 = por %p64, %p65
      %p67 = scmp.ne.s32.totalorder %s53, %s54
      %p68 = scmp.eq.s32.totalorder %s30, 2
      %p69 = por %p67, %p68
      %p71 = scmp.ne.s32.totalorder %s54, %s70
      %p72 = scmp.eq.s32.totalorder %s30, 0
      %p73 = por %p71, %p72
      %p74 = scmp.eq.s32.totalorder %s31, 0
      %s75 = scalar_select %p74, %s32, 0
      %p76 = scmp.eq.s32.totalorder %s43, 0
      %s77 = scalar_select %p76, %s39, 0
      %s78 = ssub.s32 %s75, %s77
      %p79 = scmp.eq.s32.totalorder %s78, 0
      %s81 = sadd.s32 %s80, 1
      %s82 = scalar_select %p79, %s80, %s81
      %p85 = pneg %p79
      %p86 = scmp.eq.s32.totalorder %s24, 2
      %p87 = por %p85, %p86
      %p88 = scmp.ne.s32.totalorder %s80, %s83
      %p89 = scmp.eq.s32.totalorder %s24, 0
      %p90 = por %p88, %p89
      %p91 = scmp.ne.s32.totalorder %s80, %s83
      %p92 = scmp.eq.s32.totalorder %s29, 2
      %p93 = por %p91, %p92
      %p94 = scmp.ne.s32.totalorder %s83, %s84
      %p95 = scmp.eq.s32.totalorder %s29, 0
      %p96 = por %p94, %p95
      %p97 = scmp.ne.s32.totalorder %s83, %s84
      %p98 = scmp.eq.s32.totalorder %s30, 2
      %p99 = por %p97, %p98
      %p101 = scmp.ne.s32.totalorder %s84, %s100
      %p102 = scmp.eq.s32.totalorder %s30, 0
      %p103 = por %p101, %p102
      %s105 = sadd.s32 %s104, 1
      %p108 = scmp.eq.s32.totalorder %s24, 2
      %p109 = scmp.ne.s32.totalorder %s104, %s106
      %p110 = scmp.eq.s32.totalorder %s24, 0
      %p111 = por %p109, %p110
      %p112 = scmp.ne.s32.totalorder %s104, %s106
      %p113 = scmp.eq.s32.totalorder %s29, 2
      %p114 = por %p112, %p113
      %p115 = scmp.ne.s32.totalorder %s106, %s107
      %p116 = scmp.eq.s32.totalorder %s29, 0
      %p117 = por %p115, %p116
      %p118 = scmp.ne.s32.totalorder %s106, %s107
      %p119 = scmp.eq.s32.totalorder %s30, 2
      %p120 = por %p118, %p119
      %p122 = scmp.ne.s32.totalorder %s107, %s121
      %p123 = scmp.eq.s32.totalorder %s30, 0
      %p124 = por %p122, %p123
      %s126 = sadd.s32 %s125, 1
      %p129 = scmp.eq.s32.totalorder %s24, 2
      %p130 = scmp.ne.s32.totalorder %s125, %s127
      %p131 = scmp.eq.s32.totalorder %s24, 0
      %p132 = por %p130, %p131
      %p133 = scmp.ne.s32.totalorder %s125, %s127
      %p134 = scmp.eq.s32.totalorder %s29, 2
      %p135 = por %p133, %p134
      %p136 = scmp.ne.s32.totalorder %s127, %s128
      %p137 = scmp.eq.s32.totalorder %s29, 0
      %p138 = por %p136, %p137
      %p139 = scmp.ne.s32.totalorder %s127, %s128
      %p140 = scmp.eq.s32.totalorder %s30, 2
      %p141 = por %p139, %p140
      %p143 = scmp.ne.s32.totalorder %s128, %s142
      %p144 = scmp.eq.s32.totalorder %s30, 0
      %p145 = por %p143, %p144
      %s147 = sadd.s32 %s146, 1
      %p150 = scmp.eq.s32.totalorder %s24, 2
      %p151 = scmp.ne.s32.totalorder %s146, %s148
      %p152 = scmp.eq.s32.totalorder %s24, 0
      %p153 = por %p151, %p152
      %p154 = scmp.ne.s32.totalorder %s146, %s148
      %p155 = scmp.eq.s32.totalorder %s29, 2
      %p156 = por %p154, %p155
      %p157 = scmp.ne.s32.totalorder %s148, %s149
      %p158 = scmp.eq.s32.totalorder %s29, 0
      %p159 = por %p157, %p158
      %p160 = scmp.ne.s32.totalorder %s148, %s149
      %p161 = scmp.eq.s32.totalorder %s30, 2
      %p162 = por %p160, %p161
      %p164 = scmp.ne.s32.totalorder %s149, %s163
      %p165 = scmp.eq.s32.totalorder %s30, 0
      %p166 = por %p164, %p165
      %s168 = sadd.s32 %s167, 1
      %p171 = scmp.eq.s32.totalorder %s24, 2
      %p172 = scmp.ne.s32.totalorder %s167, %s169
      %p173 = scmp.eq.s32.totalorder %s24, 0
      %p174 = por %p172, %p173
      %p175 = scmp.ne.s32.totalorder %s167, %s169
      %p176 = scmp.eq.s32.totalorder %s29, 2
      %p177 = por %p175, %p176
      %p178 = scmp.ne.s32.totalorder %s169, %s170
      %p179 = scmp.eq.s32.totalorder %s29, 0
      %p180 = por %p178, %p179
      %p181 = scmp.ne.s32.totalorder %s169, %s170
      %p182 = scmp.eq.s32.totalorder %s30, 2
      %p183 = por %p181, %p182
      %p185 = scmp.ne.s32.totalorder %s170, %s184
      %p186 = scmp.eq.s32.totalorder %s30, 0
      %p187 = por %p185, %p186
      %s189 = sadd.s32 %s188, 1
      %p192 = scmp.eq.s32.totalorder %s24, 2
      %p193 = scmp.ne.s32.totalorder %s188, %s190
      %p194 = scmp.eq.s32.totalorder %s24, 0
      %p195 = por %p193, %p194
      %p196 = scmp.ne.s32.totalorder %s188, %s190
      %p197 = scmp.eq.s32.totalorder %s29, 2
      %p198 = por %p196, %p197
      %p199 = scmp.ne.s32.totalorder %s190, %s191
      %p200 = scmp.eq.s32.totalorder %s29, 0
      %p201 = por %p199, %p200
      %p202 = scmp.ne.s32.totalorder %s190, %s191
      %p203 = scmp.eq.s32.totalorder %s30, 2
      %p204 = por %p202, %p203
      %p206 = scmp.ne.s32.totalorder %s191, %s205
      %p207 = scmp.eq.s32.totalorder %s30, 0
      %p208 = por %p206, %p207
      %s210 = sadd.s32 %s209, 1
      %p213 = scmp.eq.s32.totalorder %s24, 2
      %p214 = scmp.ne.s32.totalorder %s209, %s211
      %p215 = scmp.eq.s32.totalorder %s24, 0
      %p216 = por %p214, %p215
      %p217 = scmp.ne.s32.totalorder %s209, %s211
      %p218 = scmp.eq.s32.totalorder %s29, 2
      %p219 = por %p217, %p218
      %p220 = scmp.ne.s32.totalorder %s211, %s212
      %p221 = scmp.eq.s32.totalorder %s29, 0
      %p222 = por %p220, %p221
      %p223 = scmp.ne.s32.totalorder %s211, %s212
      %p224 = scmp.eq.s32.totalorder %s30, 2
      %p225 = por %p223, %p224
      %p227 = scmp.ne.s32.totalorder %s212, %s226
      %p228 = scmp.eq.s32.totalorder %s30, 0
      %p229 = por %p227, %p228
      %s231 = sadd.s32 %s230, 1
      %p234 = scmp.eq.s32.totalorder %s24, 2
      %p235 = scmp.ne.s32.totalorder %s230, %s232
      %p236 = scmp.eq.s32.totalorder %s24, 0
      %p237 = por %p235, %p236
      %p238 = scmp.ne.s32.totalorder %s230, %s232
      %p239 = scmp.eq.s32.totalorder %s29, 2
      %p240 = por %p238, %p239
      %p241 = scmp.ne.s32.totalorder %s232, %s233
      %p242 = scmp.eq.s32.totalorder %s29, 0
      %p243 = por %p241, %p242
      %p244 = scmp.ne.s32.totalorder %s232, %s233
      %p245 = scmp.eq.s32.totalorder %s30, 2
      %p246 = por %p244, %p245
      %p248 = scmp.ne.s32.totalorder %s233, %s247
      %p249 = scmp.eq.s32.totalorder %s30, 0
      %p250 = por %p248, %p249
      %p251 = scmp.le.s32.totalorder 1, %s24
      %p252 = scmp.lt.s32.totalorder %s24, 4
      %p253 = pnand %p251, %p252
      %p254 = pneg %p253
      // Predicated region
      $region9: #{gcn_weighted_forward.1} parent=5 // pred_check
        _
      $region10: #{gcn_weighted_forward.1} parent=5 // pred_check_branch
        %256 = sbr.rel (%p253) target = $region12
      $region11: #{gcn_weighted_forward.1} parent=5 // pred_region
        %s257 = ssub.s32 %s24, 1
        // Predicated region
        $region13: #{gcn_weighted_forward.1} parent=11 // pred_check
          %p258 = pneg %p117
        $region14: #{gcn_weighted_forward.1} parent=11 // pred_check_branch
          %260 = sbr.rel (%p258) target = $region16
        $region15: #{gcn_weighted_forward.1} parent=11 // pred_region
          %s262 = ssub.s32 1024, 1024
          %263 = vsyncadd [#allocation9], %s262
          %s264 = sshll.u32 [#allocation10], 4
          %s265 = int_to_ptr.vmem [resolvable:$true] %s264
          %270 = dma.hbm_to_vmem [thread:$0]  %s2, 1024, %s265, [#allocation9], 64, 64, 4
        $region16: #{gcn_weighted_forward.1} parent=11 // pred_fallthru
          _
        // Predicated region
        $region17: #{gcn_weighted_forward.1} parent=11 // pred_check
          %p271 = pneg %p138
        $region18: #{gcn_weighted_forward.1} parent=11 // pred_check_branch
          %273 = sbr.rel (%p271) target = $region20
        $region19: #{gcn_weighted_forward.1} parent=11 // pred_region
          %s275 = ssub.s32 16, 16
          %276 = vsyncadd [#allocation12], %s275
          %s278 = sshll.u32 [#allocation11], 4
          %s279 = int_to_ptr.vmem [resolvable:$true] %s278
          %281 = dma.hbm_to_vmem [thread:$0]  %s3, 16, %s279, [#allocation12]
        $region20: #{gcn_weighted_forward.1} parent=11 // pred_fallthru
          _
        // Predicated region
        $region21: #{gcn_weighted_forward.1} parent=11 // pred_check
          %p282 = pneg %p159
        $region22: #{gcn_weighted_forward.1} parent=11 // pred_check_branch
          %284 = sbr.rel (%p282) target = $region24
        $region23: #{gcn_weighted_forward.1} parent=11 // pred_region
          %s286 = ssub.s32 1024, 1024
          %287 = vsyncadd [#allocation12], %s286
          %s288 = sshll.u32 [#allocation13], 4
          %s289 = int_to_ptr.vmem [resolvable:$true] %s288
          %294 = dma.hbm_to_vmem [thread:$0]  %s4, 1024, %s289, [#allocation12], 64, 64, 4
        $region24: #{gcn_weighted_forward.1} parent=11 // pred_fallthru
          _
        // Predicated region
        $region25: #{gcn_weighted_forward.1} parent=11 // pred_check
          %p295 = pneg %p180
        $region26: #{gcn_weighted_forward.1} parent=11 // pred_check_branch
          %297 = sbr.rel (%p295) target = $region28
        $region27: #{gcn_weighted_forward.1} parent=11 // pred_region
          %s299 = ssub.s32 16, 16
          %300 = vsyncadd [#allocation15], %s299
          %s302 = sshll.u32 [#allocation14], 4
          %s303 = int_to_ptr.vmem [resolvable:$true] %s302
          %305 = dma.hbm_to_vmem [thread:$0]  %s5, 16, %s303, [#allocation15]
        $region28: #{gcn_weighted_forward.1} parent=11 // pred_fallthru
          _
        // Predicated region
        $region29: #{gcn_weighted_forward.1} parent=11 // pred_check
          %p306 = pneg %p201
        $region30: #{gcn_weighted_forward.1} parent=11 // pred_check_branch
          %308 = sbr.rel (%p306) target = $region32
        $region31: #{gcn_weighted_forward.1} parent=11 // pred_region
          %s310 = ssub.s32 1024, 1024
          %311 = vsyncadd [#allocation15], %s310
          %s312 = sshll.u32 [#allocation16], 4
          %s313 = int_to_ptr.vmem [resolvable:$true] %s312
          %318 = dma.hbm_to_vmem [thread:$0]  %s6, 1024, %s313, [#allocation15], 64, 64, 4
        $region32: #{gcn_weighted_forward.1} parent=11 // pred_fallthru
          _
        // Predicated region
        $region33: #{gcn_weighted_forward.1} parent=11 // pred_check
          %p319 = pneg %p222
        $region34: #{gcn_weighted_forward.1} parent=11 // pred_check_branch
          %321 = sbr.rel (%p319) target = $region36
        $region35: #{gcn_weighted_forward.1} parent=11 // pred_region
          %s323 = ssub.s32 16, 16
          %324 = vsyncadd [#allocation18], %s323
          %s326 = sshll.u32 [#allocation17], 4
          %s327 = int_to_ptr.vmem [resolvable:$true] %s326
          %329 = dma.hbm_to_vmem [thread:$0]  %s7, 16, %s327, [#allocation18]
        $region36: #{gcn_weighted_forward.1} parent=11 // pred_fallthru
          _
      $region12: #{gcn_weighted_forward.1} parent=5 // pred_fallthru
        _
      %p330 = scmp.lt.s32.totalorder %s24, 3
      // Predicated region
      $region37: #{gcn_weighted_forward.1} parent=5 // pred_check
        %p331 = pneg %p330
      $region38: #{gcn_weighted_forward.1} parent=5 // pred_check_branch
        %333 = sbr.rel (%p331) target = $region40
      $region39: #{gcn_weighted_forward.1} parent=5 // pred_region
        // Predicated region
        $region41: #{gcn_weighted_forward.1} parent=39 // pred_check
          %p334 = pneg %p60
        $region42: #{gcn_weighted_forward.1} parent=39 // pred_check_branch
          %336 = sbr.rel (%p334) target = $region44
        $region43: #{gcn_weighted_forward.1} parent=39 // pred_region
          %s337 = sand.u32 %s50, 1
          %s338 = scalar_lea.sflag [#allocation6], %s337
          %s339 = sand.u32 %s50, 1
          %s340 = smul.addr %s339, 64
          %s341 = scalar_lea.vmem [#allocation5], %s340
          %p342 = scmp.eq.s32.totalorder %s31, 0
          %s343 = scalar_select %p342, %s32, 0
          %s345 = ssub.s32 1024, 1024
          %346 = vsyncadd %s338, %s345
          %s347 = smul.addr %s343, 64
          %s348 = scalar_lea.hbm %s0, %s347
          %s349 = sshll.u32 %s341, 4
          %s350 = int_to_ptr.vmem [resolvable:$true] %s349
          %355 = dma.hbm_to_vmem [thread:$0]  %s348, 1024, %s350, %s338, 64, 64, 4
        $region44: #{gcn_weighted_forward.1} parent=39 // pred_fallthru
          _
        // Predicated region
        $region45: #{gcn_weighted_forward.1} parent=39 // pred_check
          %p356 = pneg %p90
        $region46: #{gcn_weighted_forward.1} parent=39 // pred_check_branch
          %358 = sbr.rel (%p356) target = $region48
        $region47: #{gcn_weighted_forward.1} parent=39 // pred_region
          %s359 = sand.u32 %s24, 1
          %s360 = scalar_lea.sflag [#allocation9], %s359
          %s361 = sand.u32 %s80, 1
          %s362 = smul.addr %s361, 64
          %s363 = scalar_lea.vmem [#allocation8], %s362
          %p364 = scmp.eq.s32.totalorder %s31, 0
          %s365 = scalar_select %p364, %s32, 0
          %s366 = smul.u32 16, %s365
          %s368 = ssub.s32 1024, 1024
          %369 = vsyncadd %s360, %s368
          %s370 = smul.addr %s366, 64
          %s371 = scalar_lea.hbm %s1, %s370
          %s372 = sshll.u32 %s363, 4
          %s373 = int_to_ptr.vmem [resolvable:$true] %s372
          %378 = dma.hbm_to_vmem [thread:$0]  %s371, 1024, %s373, %s360, 64, 64, 4
        $region48: #{gcn_weighted_forward.1} parent=39 // pred_fallthru
          _
      $region40: #{gcn_weighted_forward.1} parent=5 // pred_fallthru
        _
      %p379 = scmp.le.s32.totalorder 1, %s24
      %p380 = scmp.lt.s32.totalorder %s24, 4
      %p381 = pnand %p379, %p380
      %p382 = pneg %p381
      // Predicated region
      $region49: #{gcn_weighted_forward.1} parent=5 // pred_check
        _
      $region50: #{gcn_weighted_forward.1} parent=5 // pred_check_branch
        %384 = sbr.rel (%p381) target = $region52
      $region51: #{gcn_weighted_forward.1} parent=5 // pred_region
        %s385 = ssub.s32 %s24, 1
        %s386 = sand.u32 %s53, 1
        %s387 = scalar_lea.sflag [#allocation6], %s386
        %s388 = sand.u32 %s53, 1
        %s389 = smul.addr %s388, 64
        %s390 = scalar_lea.vmem [#allocation5], %s389
        // Predicated region
        $region53: #{gcn_weighted_forward.1} parent=51 // pred_check
          %p391 = pneg %p66
        $region54: #{gcn_weighted_forward.1} parent=51 // pred_check_branch
          %393 = sbr.rel (%p391) target = $region56
        $region55: #{gcn_weighted_forward.1} parent=51 // pred_region
          %394 = dma.done %s387, 1024
        $region56: #{gcn_weighted_forward.1} parent=51 // pred_fallthru
          _
        %s395 = sand.u32 %s29, 1
        %s396 = scalar_lea.sflag [#allocation9], %s395
        %s397 = sand.u32 %s83, 1
        %s398 = smul.addr %s397, 64
        %s399 = scalar_lea.vmem [#allocation8], %s398
        // Predicated region
        $region57: #{gcn_weighted_forward.1} parent=51 // pred_check
          %p400 = pneg %p96
        $region58: #{gcn_weighted_forward.1} parent=51 // pred_check_branch
          %402 = sbr.rel (%p400) target = $region60
        $region59: #{gcn_weighted_forward.1} parent=51 // pred_region
          %403 = dma.done %s396, 1024
        $region60: #{gcn_weighted_forward.1} parent=51 // pred_fallthru
          _
        // Predicated region
        $region61: #{gcn_weighted_forward.1} parent=51 // pred_check
          %p404 = pneg %p117
        $region62: #{gcn_weighted_forward.1} parent=51 // pred_check_branch
          %406 = sbr.rel (%p404) target = $region64
        $region63: #{gcn_weighted_forward.1} parent=51 // pred_region
          %407 = dma.done [#allocation9], 1024
        $region64: #{gcn_weighted_forward.1} parent=51 // pred_fallthru
          _
        // Predicated region
        $region65: #{gcn_weighted_forward.1} parent=51 // pred_check
          %p408 = pneg %p138
        $region66: #{gcn_weighted_forward.1} parent=51 // pred_check_branch
          %410 = sbr.rel (%p408) target = $region68
        $region67: #{gcn_weighted_forward.1} parent=51 // pred_region
          %411 = dma.done [#allocation12], 16
        $region68: #{gcn_weighted_forward.1} parent=51 // pred_fallthru
          _
        // Predicated region
        $region69: #{gcn_weighted_forward.1} parent=51 // pred_check
          %p412 = pneg %p159
        $region70: #{gcn_weighted_forward.1} parent=51 // pred_check_branch
          %414 = sbr.rel (%p412) target = $region72
        $region71: #{gcn_weighted_forward.1} parent=51 // pred_region
          %415 = dma.done [#allocation12], 1024
        $region72: #{gcn_weighted_forward.1} parent=51 // pred_fallthru
          _
        // Predicated region
        $region73: #{gcn_weighted_forward.1} parent=51 // pred_check
          %p416 = pneg %p180
        $region74: #{gcn_weighted_forward.1} parent=51 // pred_check_branch
          %418 = sbr.rel (%p416) target = $region76
        $region75: #{gcn_weighted_forward.1} parent=51 // pred_region
          %419 = dma.done [#allocation15], 16
        $region76: #{gcn_weighted_forward.1} parent=51 // pred_fallthru
          _
        // Predicated region
        $region77: #{gcn_weighted_forward.1} parent=51 // pred_check
          %p420 = pneg %p201
        $region78: #{gcn_weighted_forward.1} parent=51 // pred_check_branch
          %422 = sbr.rel (%p420) target = $region80
        $region79: #{gcn_weighted_forward.1} parent=51 // pred_region
          %423 = dma.done [#allocation15], 1024
        $region80: #{gcn_weighted_forward.1} parent=51 // pred_fallthru
          _
        // Predicated region
        $region81: #{gcn_weighted_forward.1} parent=51 // pred_check
          %p424 = pneg %p222
        $region82: #{gcn_weighted_forward.1} parent=51 // pred_check_branch
          %426 = sbr.rel (%p424) target = $region84
        $region83: #{gcn_weighted_forward.1} parent=51 // pred_region
          %427 = dma.done [#allocation18], 16
        $region84: #{gcn_weighted_forward.1} parent=51 // pred_fallthru
          _
        %s428 = sand.u32 %s53, 1
        %s429 = scalar_lea.sflag [#allocation6], %s428
        %s430 = sand.u32 %s53, 1
        %s431 = smul.addr %s430, 64
        %s432 = scalar_lea.vmem [#allocation5], %s431
        %p433 = pneg %p66
        %p434 = pneg %p63
        %s435 = sand.u32 %s29, 1
        %s436 = scalar_lea.sflag [#allocation9], %s435
        %s437 = sand.u32 %s83, 1
        %s438 = smul.addr %s437, 64
        %s439 = scalar_lea.vmem [#allocation8], %s438
        %p440 = pneg %p96
        %p441 = pneg %p93
        %p442 = pneg %p117
        %p443 = pneg %p114
        %p444 = pneg %p138
        %p445 = pneg %p135
        %p446 = pneg %p159
        %p447 = pneg %p156
        %p448 = pneg %p180
        %p449 = pneg %p177
        %p450 = pneg %p201
        %p451 = pneg %p198
        %p452 = pneg %p222
        %p453 = pneg %p219
        %p454 = pneg %p243
        %p455 = pneg %p240
        %p456 = scmp.eq.s32.totalorder %s33, 0
        %s457 = scalar_select %p456, %s34, 0
        %p458 = scmp.eq.s32.totalorder %s33, 0
        %s459 = scalar_select %p458, %s34, 0
        %s460 = smul.u32 16, %s459
        %p462 = scmp.eq.s32.totalorder %s34, 0
        // Predicated region
        $region85: #{gcn_weighted_forward.1} parent=51 // pred_check
          %p463 = pneg %p462
        $region86: #{gcn_weighted_forward.1} parent=51 // pred_check_branch
          %465 = sbr.rel (%p463) target = $region88
        $region87: #{gcn_weighted_forward.1} parent=51 // pred_region
          %466 = vst [vmem:[#allocation4] sm:$0xff] 0.0
          %467 = vst [vmem:[#allocation4 + $0x8] sm:$0xff] 0.0
          %468 = vst [vmem:[#allocation4 + $0x10] sm:$0xff] 0.0
          %469 = vst [vmem:[#allocation4 + $0x18] sm:$0xff] 0.0
          %470 = vst [vmem:[#allocation4 + $0x20] sm:$0xff] 0.0
          %471 = vst [vmem:[#allocation4 + $0x28] sm:$0xff] 0.0
          %472 = vst [vmem:[#allocation4 + $0x30] sm:$0xff] 0.0
          %473 = vst [vmem:[#allocation4 + $0x38] sm:$0xff] 0.0
          %474 = vst [vmem:[#allocation4 + $0x40] sm:$0xff] 0.0
          %475 = vst [vmem:[#allocation4 + $0x48] sm:$0xff] 0.0
          %476 = vst [vmem:[#allocation4 + $0x50] sm:$0xff] 0.0
          %477 = vst [vmem:[#allocation4 + $0x58] sm:$0xff] 0.0
          %478 = vst [vmem:[#allocation4 + $0x60] sm:$0xff] 0.0
          %479 = vst [vmem:[#allocation4 + $0x68] sm:$0xff] 0.0
          %480 = vst [vmem:[#allocation4 + $0x70] sm:$0xff] 0.0
          %481 = vst [vmem:[#allocation4 + $0x78] sm:$0xff] 0.0
        $region88: #{gcn_weighted_forward.1} parent=51 // pred_fallthru
          _
        %p482 = scmp.eq.s32.totalorder %s33, 0
        // Predicated region
        $region89: #{gcn_weighted_forward.1} parent=51 // pred_check
          %p483 = pneg %p482
        $region90: #{gcn_weighted_forward.1} parent=51 // pred_check_branch
          %485 = sbr.rel (%p483) target = $region92
        $region91: #{gcn_weighted_forward.1} parent=51 // pred_region
          %v486 = vld [vmem:[%s390] sm:$0xf]
          %v487 = vld [vmem:[%s390 + $0x4] sm:$0xf]
          %v488 = vld [vmem:[%s390 + $0x8] sm:$0xf]
          %v489 = vld [vmem:[%s390 + $0xc] sm:$0xf]
          %v490 = vld [vmem:[%s390 + $0x10] sm:$0xf]
          %v491 = vld [vmem:[%s390 + $0x14] sm:$0xf]
          %v492 = vld [vmem:[%s390 + $0x18] sm:$0xf]
          %v493 = vld [vmem:[%s390 + $0x1c] sm:$0xf]
          %v494 = vld [vmem:[%s390 + $0x20] sm:$0xf]
          %v495 = vld [vmem:[%s390 + $0x24] sm:$0xf]
          %v496 = vld [vmem:[%s390 + $0x28] sm:$0xf]
          %v497 = vld [vmem:[%s390 + $0x2c] sm:$0xf]
          %v498 = vld [vmem:[%s390 + $0x30] sm:$0xf]
          %v499 = vld [vmem:[%s390 + $0x34] sm:$0xf]
          %v500 = vld [vmem:[%s390 + $0x38] sm:$0xf]
          %v501 = vld [vmem:[%s390 + $0x3c] sm:$0xf]
          %v518 = vunpack.c.l.b16 %v486
          %v519 = vunpack.c.l.b16 %v487
          %v520 = vunpack.c.l.b16 %v488
          %v521 = vunpack.c.l.b16 %v489
          %v522 = vunpack.c.l.b16 %v490
          %v523 = vunpack.c.l.b16 %v491
          %v524 = vunpack.c.l.b16 %v492
          %v525 = vunpack.c.l.b16 %v493
          %v526 = vunpack.c.l.b16 %v494
          %v527 = vunpack.c.l.b16 %v495
          %v528 = vunpack.c.l.b16 %v496
          %v529 = vunpack.c.l.b16 %v497
          %v530 = vunpack.c.l.b16 %v498
          %v531 = vunpack.c.l.b16 %v499
          %v532 = vunpack.c.l.b16 %v500
          %v533 = vunpack.c.l.b16 %v501
          %v534 = vpack.c.b16 %v519, %v518
          %v535 = vpack.c.b16 %v521, %v520
          %v536 = vpack.c.b16 %v523, %v522
          %v537 = vpack.c.b16 %v525, %v524
          %v538 = vpack.c.b16 %v527, %v526
          %v539 = vpack.c.b16 %v529, %v528
          %v540 = vpack.c.b16 %v531, %v530
          %v541 = vpack.c.b16 %v533, %v532
          %s550 = smul.u32 %s34, 8
          %s551 = smul.addr %s550, 8
          %s552 = scalar_lea.vmem [#allocation2], %s551
          %553 = vst [vmem:[%s552] sm:$0xff] %v534
          %554 = vst [vmem:[%s552 + $0x8] sm:$0xff] %v535
          %555 = vst [vmem:[%s552 + $0x10] sm:$0xff] %v536
          %556 = vst [vmem:[%s552 + $0x18] sm:$0xff] %v537
          %557 = vst [vmem:[%s552 + $0x20] sm:$0xff] %v538
          %558 = vst [vmem:[%s552 + $0x28] sm:$0xff] %v539
          %559 = vst [vmem:[%s552 + $0x30] sm:$0xff] %v540
          %560 = vst [vmem:[%s552 + $0x38] sm:$0xff] %v541
          %v561 = vld [vmem:[%s399] sm:$0xf]
          %v562 = vld [vmem:[%s399 + $0x4] sm:$0xf]
          %v563 = vld [vmem:[%s399 + $0x8] sm:$0xf]
          %v564 = vld [vmem:[%s399 + $0xc] sm:$0xf]
          %v565 = vld [vmem:[%s399 + $0x10] sm:$0xf]
          %v566 = vld [vmem:[%s399 + $0x14] sm:$0xf]
          %v567 = vld [vmem:[%s399 + $0x18] sm:$0xf]
          %v568 = vld [vmem:[%s399 + $0x1c] sm:$0xf]
          %v569 = vld [vmem:[%s399 + $0x20] sm:$0xf]
          %v570 = vld [vmem:[%s399 + $0x24] sm:$0xf]
          %v571 = vld [vmem:[%s399 + $0x28] sm:$0xf]
          %v572 = vld [vmem:[%s399 + $0x2c] sm:$0xf]
          %v573 = vld [vmem:[%s399 + $0x30] sm:$0xf]
          %v574 = vld [vmem:[%s399 + $0x34] sm:$0xf]
          %v575 = vld [vmem:[%s399 + $0x38] sm:$0xf]
          %v576 = vld [vmem:[%s399 + $0x3c] sm:$0xf]
          %v577 = vld [vmem:[#allocation10] sm:$0xf]
          %v578 = vld [vmem:[#allocation10 + $0x4] sm:$0xf]
          %v579 = vld [vmem:[#allocation10 + $0x8] sm:$0xf]
          %v580 = vld [vmem:[#allocation10 + $0xc] sm:$0xf]
          %v581 = vld [vmem:[#allocation10 + $0x10] sm:$0xf]
          %v582 = vld [vmem:[#allocation10 + $0x14] sm:$0xf]
          %v583 = vld [vmem:[#allocation10 + $0x18] sm:$0xf]
          %v584 = vld [vmem:[#allocation10 + $0x1c] sm:$0xf]
          %v585 = vld [vmem:[#allocation10 + $0x20] sm:$0xf]
          %v586 = vld [vmem:[#allocation10 + $0x24] sm:$0xf]
          %v587 = vld [vmem:[#allocation10 + $0x28] sm:$0xf]
          %v588 = vld [vmem:[#allocation10 + $0x2c] sm:$0xf]
          %v589 = vld [vmem:[#allocation10 + $0x30] sm:$0xf]
          %v590 = vld [vmem:[#allocation10 + $0x34] sm:$0xf]
          %v591 = vld [vmem:[#allocation10 + $0x38] sm:$0xf]
          %v592 = vld [vmem:[#allocation10 + $0x3c] sm:$0xf]
          %v609 = vunpack.c.l.b16 %v561
          %v610 = vunpack.c.l.b16 %v562
          %v611 = vunpack.c.l.b16 %v563
          %v612 = vunpack.c.l.b16 %v564
          %v613 = vunpack.c.l.b16 %v565
          %v614 = vunpack.c.l.b16 %v566
          %v615 = vunpack.c.l.b16 %v567
          %v616 = vunpack.c.l.b16 %v568
          %v617 = vunpack.c.l.b16 %v569
          %v618 = vunpack.c.l.b16 %v570
          %v619 = vunpack.c.l.b16 %v571
          %v620 = vunpack.c.l.b16 %v572
          %v621 = vunpack.c.l.b16 %v573
          %v622 = vunpack.c.l.b16 %v574
          %v623 = vunpack.c.l.b16 %v575
          %v624 = vunpack.c.l.b16 %v576
          %v625 = vpack.c.b16 %v610, %v609
          %v626 = vpack.c.b16 %v612, %v611
          %v627 = vpack.c.b16 %v614, %v613
          %v628 = vpack.c.b16 %v616, %v615
          %v629 = vpack.c.b16 %v618, %v617
          %v630 = vpack.c.b16 %v620, %v619
          %v631 = vpack.c.b16 %v622, %v621
          %v632 = vpack.c.b16 %v624, %v623
          %v657 = vunpack.c.l.b16 %v577
          %v658 = vunpack.c.l.b16 %v578
          %v659 = vunpack.c.l.b16 %v579
          %v660 = vunpack.c.l.b16 %v580
          %v661 = vunpack.c.l.b16 %v581
          %v662 = vunpack.c.l.b16 %v582
          %v663 = vunpack.c.l.b16 %v583
          %v664 = vunpack.c.l.b16 %v584
          %v665 = vunpack.c.l.b16 %v585
          %v666 = vunpack.c.l.b16 %v586
          %v667 = vunpack.c.l.b16 %v587
          %v668 = vunpack.c.l.b16 %v588
          %v669 = vunpack.c.l.b16 %v589
          %v670 = vunpack.c.l.b16 %v590
          %v671 = vunpack.c.l.b16 %v591
          %v672 = vunpack.c.l.b16 %v592
          %v673 = vpack.c.b16 %v658, %v657
          %v674 = vpack.c.b16 %v660, %v659
          %v675 = vpack.c.b16 %v662, %v661
          %v676 = vpack.c.b16 %v664, %v663
          %v677 = vpack.c.b16 %v666, %v665
          %v678 = vpack.c.b16 %v668, %v667
          %v679 = vpack.c.b16 %v670, %v669
          %v680 = vpack.c.b16 %v672, %v671
          %689 = vmatprep.subr.bf16.mxu0 0
          %690 = vmatpush1.bf16.msra.mxu0 %v673
          %691 = vmatprep.subr.bf16.mxu0 0
          %692 = vmatpush1.bf16.msra.mxu0 %v674
          %693 = vmatprep.subr.bf16.mxu0 0
          %694 = vmatpush1.bf16.msra.mxu0 %v675
          %695 = vmatprep.subr.bf16.mxu0 0
          %696 = vmatpush1.bf16.msra.mxu0 %v676
          %697 = vmatprep.subr.bf16.mxu0 0
          %698 = vmatpush1.bf16.msra.mxu0 %v677
          %699 = vmatprep.subr.bf16.mxu0 0
          %700 = vmatpush1.bf16.msra.mxu0 %v678
          %701 = vmatprep.subr.bf16.mxu0 0
          %702 = vmatpush1.bf16.msra.mxu0 %v679
          %703 = vmatprep.subr.bf16.mxu0 0
          %704 = vmatpush1.bf16.msra.mxu0 %v680
          %705 = vmatprep.subr.bf16.mxu0 0
          %706 = vmatpush1.bf16.msra.mxu0 0
          %707 = vmatprep.subr.bf16.mxu0 0
          %708 = vmatpush1.bf16.msra.mxu0 0
          %709 = vmatprep.subr.bf16.mxu0 0
          %710 = vmatpush1.bf16.msra.mxu0 0
          %711 = vmatprep.subr.bf16.mxu0 0
          %712 = vmatpush1.bf16.msra.mxu0 0
          %713 = vmatprep.subr.bf16.mxu0 0
          %714 = vmatpush1.bf16.msra.mxu0 0
          %715 = vmatprep.subr.bf16.mxu0 0
          %716 = vmatpush1.bf16.msra.mxu0 0
          %717 = vmatprep.subr.bf16.mxu0 0
          %718 = vmatpush1.bf16.msra.mxu0 0
          %719 = vmatprep.subr.bf16.mxu0 0
          %720 = vmatpush1.bf16.msra.mxu0 0
          %721 = vmatprep.mubr.bf16.mxu0 0
          %722 = vmatmul.mubr.bf16.gmra.mrb[0].mxu0 %v625
          %v723 = vpop.f32.mrb[0].mxu0
          %v724 = vadd.f32 0.0, %v723
          %v725 = vpop.f32.mrb[0].mxu0
          %v726 = vpop.f32.mrb[0].mxu0
          %v727 = vadd.f32 0.0, %v726
          %v728 = vpop.f32.mrb[0].mxu0
          %729 = vmatprep.mubr.bf16.mxu0 0
          %730 = vmatmul.mubr.bf16.gmra.mrb[0].mxu0 %v626
          %v731 = vpop.f32.mrb[0].mxu0
          %v732 = vadd.f32 0.0, %v731
          %v733 = vpop.f32.mrb[0].mxu0
          %v734 = vpop.f32.mrb[0].mxu0
          %v735 = vadd.f32 0.0, %v734
          %v736 = vpop.f32.mrb[0].mxu0
          %737 = vmatprep.mubr.bf16.mxu0 0
          %738 = vmatmul.mubr.bf16.gmra.mrb[0].mxu0 %v627
          %v739 = vpop.f32.mrb[0].mxu0
          %v740 = vadd.f32 0.0, %v739
          %v741 = vpop.f32.mrb[0].mxu0
          %v742 = vpop.f32.mrb[0].mxu0
          %v743 = vadd.f32 0.0, %v742
          %v744 = vpop.f32.mrb[0].mxu0
          %745 = vmatprep.mubr.bf16.mxu0 0
          %746 = vmatmul.mubr.bf16.gmra.mrb[0].mxu0 %v628
          %v747 = vpop.f32.mrb[0].mxu0
          %v748 = vadd.f32 0.0, %v747
          %v749 = vpop.f32.mrb[0].mxu0
          %v750 = vpop.f32.mrb[0].mxu0
          %v751 = vadd.f32 0.0, %v750
          %v752 = vpop.f32.mrb[0].mxu0
          %753 = vmatprep.mubr.bf16.mxu0 0
          %754 = vmatmul.mubr.bf16.gmra.mrb[0].mxu0 %v629
          %v755 = vpop.f32.mrb[0].mxu0
          %v756 = vadd.f32 0.0, %v755
          %v757 = vpop.f32.mrb[0].mxu0
          %v758 = vpop.f32.mrb[0].mxu0
          %v759 = vadd.f32 0.0, %v758
          %v760 = vpop.f32.mrb[0].mxu0
          %761 = vmatprep.mubr.bf16.mxu0 0
          %762 = vmatmul.mubr.bf16.gmra.mrb[0].mxu0 %v630
          %v763 = vpop.f32.mrb[0].mxu0
          %v764 = vadd.f32 0.0, %v763
          %v765 = vpop.f32.mrb[0].mxu0
          %v766 = vpop.f32.mrb[0].mxu0
          %v767 = vadd.f32 0.0, %v766
          %v768 = vpop.f32.mrb[0].mxu0
          %769 = vmatprep.mubr.bf16.mxu0 0
          %770 = vmatmul.mubr.bf16.gmra.mrb[0].mxu0 %v631
          %v771 = vpop.f32.mrb[0].mxu0
          %v772 = vadd.f32 0.0, %v771
          %v773 = vpop.f32.mrb[0].mxu0
          %v774 = vpop.f32.mrb[0].mxu0
          %v775 = vadd.f32 0.0, %v774
          %v776 = vpop.f32.mrb[0].mxu0
          %777 = vmatprep.mubr.bf16.mxu0 0
          %778 = vmatmul.mubr.bf16.gmra.mrb[0].mxu0 %v632
          %v779 = vpop.f32.mrb[0].mxu0
          %v780 = vadd.f32 0.0, %v779
          %v781 = vpop.f32.mrb[0].mxu0
          %v782 = vpop.f32.mrb[0].mxu0
          %v783 = vadd.f32 0.0, %v782
          %v784 = vpop.f32.mrb[0].mxu0
          %785 = vdwg.mxu0
          %v786 = vld [vmem:[#allocation4] sm:$0xff]
          %v787 = vld [vmem:[#allocation4 + $0x8] sm:$0xff]
          %v788 = vld [vmem:[#allocation4 + $0x10] sm:$0xff]
          %v789 = vld [vmem:[#allocation4 + $0x18] sm:$0xff]
          %v790 = vld [vmem:[#allocation4 + $0x20] sm:$0xff]
          %v791 = vld [vmem:[#allocation4 + $0x28] sm:$0xff]
          %v792 = vld [vmem:[#allocation4 + $0x30] sm:$0xff]
          %v793 = vld [vmem:[#allocation4 + $0x38] sm:$0xff]
          %v794 = vld [vmem:[#allocation4 + $0x40] sm:$0xff]
          %v795 = vld [vmem:[#allocation4 + $0x48] sm:$0xff]
          %v796 = vld [vmem:[#allocation4 + $0x50] sm:$0xff]
          %v797 = vld [vmem:[#allocation4 + $0x58] sm:$0xff]
          %v798 = vld [vmem:[#allocation4 + $0x60] sm:$0xff]
          %v799 = vld [vmem:[#allocation4 + $0x68] sm:$0xff]
          %v800 = vld [vmem:[#allocation4 + $0x70] sm:$0xff]
          %v801 = vld [vmem:[#allocation4 + $0x78] sm:$0xff]
          %v802 = vpack.c.bf16 %v727, %v724
          %v803 = vpack.c.bf16 %v735, %v732
          %v804 = vpack.c.bf16 %v743, %v740
          %v805 = vpack.c.bf16 %v751, %v748
          %v806 = vpack.c.bf16 %v759, %v756
          %v807 = vpack.c.bf16 %v767, %v764
          %v808 = vpack.c.bf16 %v775, %v772
          %v809 = vpack.c.bf16 %v783, %v780
          %810 = vmatprep.subr.bf16.mxu0 0
          %811 = vmatpush1.bf16.msra.mxu0 %v802
          %812 = vmatprep.subr.bf16.mxu0 0
          %813 = vmatpush1.bf16.msra.mxu0 %v803
          %814 = vmatprep.subr.bf16.mxu0 0
          %815 = vmatpush1.bf16.msra.mxu0 %v804
          %816 = vmatprep.subr.bf16.mxu0 0
          %817 = vmatpush1.bf16.msra.mxu0 %v805
          %818 = vmatprep.subr.bf16.mxu0 0
          %819 = vmatpush1.bf16.msra.mxu0 %v806
          %820 = vmatprep.subr.bf16.mxu0 0
          %821 = vmatpush1.bf16.msra.mxu0 %v807
          %822 = vmatprep.subr.bf16.mxu0 0
          %823 = vmatpush1.bf16.msra.mxu0 %v808
          %824 = vmatprep.subr.bf16.mxu0 0
          %825 = vmatpush1.bf16.msra.mxu0 %v809
          %826 = vmatprep.subr.bf16.mxu0 0
          %827 = vmatpush1.bf16.msra.mxu0 0
          %828 = vmatprep.subr.bf16.mxu0 0
          %829 = vmatpush1.bf16.msra.mxu0 0
          %830 = vmatprep.subr.bf16.mxu0 0
          %831 = vmatpush1.bf16.msra.mxu0 0
          %832 = vmatprep.subr.bf16.mxu0 0
          %833 = vmatpush1.bf16.msra.mxu0 0
          %834 = vmatprep.subr.bf16.mxu0 0
          %835 = vmatpush1.bf16.msra.mxu0 0
          %836 = vmatprep.subr.bf16.mxu0 0
          %837 = vmatpush1.bf16.msra.mxu0 0
          %838 = vmatprep.subr.bf16.mxu0 0
          %839 = vmatpush1.bf16.msra.mxu0 0
          %840 = vmatprep.subr.bf16.mxu0 0
          %841 = vmatpush1.bf16.msra.mxu0 0
          %842 = vmatprep.mubr.bf16.mxu0 0
          %843 = vmatmul.mubr.bf16.gmra.mrb[0].mxu0 %v534
          %v844 = vpop.f32.mrb[0].mxu0
          %v845 = vadd.f32 0.0, %v844
          %v846 = vpop.f32.mrb[0].mxu0
          %v847 = vpop.f32.mrb[0].mxu0
          %v848 = vadd.f32 0.0, %v847
          %v849 = vpop.f32.mrb[0].mxu0
          %850 = vmatprep.mubr.bf16.mxu0 0
          %851 = vmatmul.mubr.bf16.gmra.mrb[0].mxu0 %v535
          %v852 = vpop.f32.mrb[0].mxu0
          %v853 = vadd.f32 0.0, %v852
          %v854 = vpop.f32.mrb[0].mxu0
          %v855 = vpop.f32.mrb[0].mxu0
          %v856 = vadd.f32 0.0, %v855
          %v857 = vpop.f32.mrb[0].mxu0
          %858 = vmatprep.mubr.bf16.mxu0 0
          %859 = vmatmul.mubr.bf16.gmra.mrb[0].mxu0 %v536
          %v860 = vpop.f32.mrb[0].mxu0
          %v861 = vadd.f32 0.0, %v860
          %v862 = vpop.f32.mrb[0].mxu0
          %v863 = vpop.f32.mrb[0].mxu0
          %v864 = vadd.f32 0.0, %v863
          %v865 = vpop.f32.mrb[0].mxu0
          %866 = vmatprep.mubr.bf16.mxu0 0
          %867 = vmatmul.mubr.bf16.gmra.mrb[0].mxu0 %v537
          %v868 = vpop.f32.mrb[0].mxu0
          %v869 = vadd.f32 0.0, %v868
          %v870 = vpop.f32.mrb[0].mxu0
          %v871 = vpop.f32.mrb[0].mxu0
          %v872 = vadd.f32 0.0, %v871
          %v873 = vpop.f32.mrb[0].mxu0
          %874 = vmatprep.mubr.bf16.mxu0 0
          %875 = vmatmul.mubr.bf16.gmra.mrb[0].mxu0 %v538
          %v876 = vpop.f32.mrb[0].mxu0
          %v877 = vadd.f32 0.0, %v876
          %v878 = vpop.f32.mrb[0].mxu0
          %v879 = vpop.f32.mrb[0].mxu0
          %v880 = vadd.f32 0.0, %v879
          %v881 = vpop.f32.mrb[0].mxu0
          %882 = vmatprep.mubr.bf16.mxu0 0
          %883 = vmatmul.mubr.bf16.gmra.mrb[0].mxu0 %v539
          %v884 = vpop.f32.mrb[0].mxu0
          %v885 = vadd.f32 0.0, %v884
          %v886 = vpop.f32.mrb[0].mxu0
          %v887 = vpop.f32.mrb[0].mxu0
          %v888 = vadd.f32 0.0, %v887
          %v889 = vpop.f32.mrb[0].mxu0
          %890 = vmatprep.mubr.bf16.mxu0 0
          %891 = vmatmul.mubr.bf16.gmra.mrb[0].mxu0 %v540
          %v892 = vpop.f32.mrb[0].mxu0
          %v893 = vadd.f32 0.0, %v892
          %v894 = vpop.f32.mrb[0].mxu0
          %v895 = vpop.f32.mrb[0].mxu0
          %v896 = vadd.f32 0.0, %v895
          %v897 = vpop.f32.mrb[0].mxu0
          %898 = vmatprep.mubr.bf16.mxu0 0
          %899 = vmatmul.mubr.bf16.gmra.mrb[0].mxu0 %v541
          %v900 = vpop.f32.mrb[0].mxu0
          %v901 = vadd.f32 0.0, %v900
          %v902 = vpop.f32.mrb[0].mxu0
          %v903 = vpop.f32.mrb[0].mxu0
          %v904 = vadd.f32 0.0, %v903
          %v905 = vpop.f32.mrb[0].mxu0
          %906 = vdwg.mxu0
          %v907 = vadd.f32 %v786, %v845
          %v908 = vadd.f32 %v787, %v848
          %v909 = vadd.f32 %v788, %v853
          %v910 = vadd.f32 %v789, %v856
          %v911 = vadd.f32 %v790, %v861
          %v912 = vadd.f32 %v791, %v864
          %v913 = vadd.f32 %v792, %v869
          %v914 = vadd.f32 %v793, %v872
          %v915 = vadd.f32 %v794, %v877
          %v916 = vadd.f32 %v795, %v880
          %v917 = vadd.f32 %v796, %v885
          %v918 = vadd.f32 %v797, %v888
          %v919 = vadd.f32 %v798, %v893
          %v920 = vadd.f32 %v799, %v896
          %v921 = vadd.f32 %v800, %v901
          %v922 = vadd.f32 %v801, %v904
          %923 = vst [vmem:[#allocation4] sm:$0xff] %v907
          %924 = vst [vmem:[#allocation4 + $0x8] sm:$0xff] %v908
          %925 = vst [vmem:[#allocation4 + $0x10] sm:$0xff] %v909
          %926 = vst [vmem:[#allocation4 + $0x18] sm:$0xff] %v910
          %927 = vst [vmem:[#allocation4 + $0x20] sm:$0xff] %v911
          %928 = vst [vmem:[#allocation4 + $0x28] sm:$0xff] %v912
          %929 = vst [vmem:[#allocation4 + $0x30] sm:$0xff] %v913
          %930 = vst [vmem:[#allocation4 + $0x38] sm:$0xff] %v914
          %931 = vst [vmem:[#allocation4 + $0x40] sm:$0xff] %v915
          %932 = vst [vmem:[#allocation4 + $0x48] sm:$0xff] %v916
          %933 = vst [vmem:[#allocation4 + $0x50] sm:$0xff] %v917
          %934 = vst [vmem:[#allocation4 + $0x58] sm:$0xff] %v918
          %935 = vst [vmem:[#allocation4 + $0x60] sm:$0xff] %v919
          %936 = vst [vmem:[#allocation4 + $0x68] sm:$0xff] %v920
          %937 = vst [vmem:[#allocation4 + $0x70] sm:$0xff] %v921
          %938 = vst [vmem:[#allocation4 + $0x78] sm:$0xff] %v922
        $region92: #{gcn_weighted_forward.1} parent=51 // pred_fallthru
          _
        %p939 = scmp.gt.s32.totalorder %s33, 0
        // Predicated region
        $region93: #{gcn_weighted_forward.1} parent=51 // pred_check
          %p940 = pneg %p939
        $region94: #{gcn_weighted_forward.1} parent=51 // pred_check_branch
          %942 = sbr.rel (%p940) target = $region96
        $region95: #{gcn_weighted_forward.1} parent=51 // pred_region
          %p943 = scmp.eq.s32.totalorder %s33, 1
          %v944 = vld [vmem:[#allocation13] sm:$0xf]
          %v945 = vld [vmem:[#allocation13 + $0x4] sm:$0xf]
          %v946 = vld [vmem:[#allocation13 + $0x8] sm:$0xf]
          %v947 = vld [vmem:[#allocation13 + $0xc] sm:$0xf]
          %v948 = vld [vmem:[#allocation13 + $0x10] sm:$0xf]
          %v949 = vld [vmem:[#allocation13 + $0x14] sm:$0xf]
          %v950 = vld [vmem:[#allocation13 + $0x18] sm:$0xf]
          %v951 = vld [vmem:[#allocation13 + $0x1c] sm:$0xf]
          %v952 = vld [vmem:[#allocation13 + $0x20] sm:$0xf]
          %v953 = vld [vmem:[#allocation13 + $0x24] sm:$0xf]
          %v954 = vld [vmem:[#allocation13 + $0x28] sm:$0xf]
          %v955 = vld [vmem:[#allocation13 + $0x2c] sm:$0xf]
          %v956 = vld [vmem:[#allocation13 + $0x30] sm:$0xf]
          %v957 = vld [vmem:[#allocation13 + $0x34] sm:$0xf]
          %v958 = vld [vmem:[#allocation13 + $0x38] sm:$0xf]
          %v959 = vld [vmem:[#allocation13 + $0x3c] sm:$0xf]
          %v960 = vld [vmem:[#allocation16] sm:$0xf]
          %v961 = vld [vmem:[#allocation16 + $0x4] sm:$0xf]
          %v962 = vld [vmem:[#allocation16 + $0x8] sm:$0xf]
          %v963 = vld [vmem:[#allocation16 + $0xc] sm:$0xf]
          %v964 = vld [vmem:[#allocation16 + $0x10] sm:$0xf]
          %v965 = vld [vmem:[#allocation16 + $0x14] sm:$0xf]
          %v966 = vld [vmem:[#allocation16 + $0x18] sm:$0xf]
          %v967 = vld [vmem:[#allocation16 + $0x1c] sm:$0xf]
          %v968 = vld [vmem:[#allocation16 + $0x20] sm:$0xf]
          %v969 = vld [vmem:[#allocation16 + $0x24] sm:$0xf]
          %v970 = vld [vmem:[#allocation16 + $0x28] sm:$0xf]
          %v971 = vld [vmem:[#allocation16 + $0x2c] sm:$0xf]
          %v972 = vld [vmem:[#allocation16 + $0x30] sm:$0xf]
          %v973 = vld [vmem:[#allocation16 + $0x34] sm:$0xf]
          %v974 = vld [vmem:[#allocation16 + $0x38] sm:$0xf]
          %v975 = vld [vmem:[#allocation16 + $0x3c] sm:$0xf]
          %s976 = scalar_select %p943, 1, 0
          %v977 = vstv %s976
          %vm978 = vcmp.eq.s32.totalorder %v977, 1
          %v979 = vsel %vm978, %v944, %v960
          %v980 = vsel %vm978, %v945, %v961
          %v981 = vsel %vm978, %v946, %v962
          %v982 = vsel %vm978, %v947, %v963
          %v983 = vsel %vm978, %v948, %v964
          %v984 = vsel %vm978, %v949, %v965
          %v985 = vsel %vm978, %v950, %v966
          %v986 = vsel %vm978, %v951, %v967
          %v987 = vsel %vm978, %v952, %v968
          %v988 = vsel %vm978, %v953, %v969
          %v989 = vsel %vm978, %v954, %v970
          %v990 = vsel %vm978, %v955, %v971
          %v991 = vsel %vm978, %v956, %v972
          %v992 = vsel %vm978, %v957, %v973
          %v993 = vsel %vm978, %v958, %v974
          %v994 = vsel %vm978, %v959, %v975
          %s995 = smul.u32 %s34, 128
          %s996 = sshra.s32 %s995, 4
          %s997 = sand.u32 %s995, 15
          %s998 = smul.addr %s996, 8
          %s999 = scalar_lea.vmem [#allocation3], %s998
          %v1000 = vld [vmem:[%s999] sm:$0xff]
          %v1001 = vld [vmem:[%s999 + $0x8] sm:$0xff]
          %v1002 = vld [vmem:[%s999 + $0x10] sm:$0xff]
          %v1003 = vld [vmem:[%s999 + $0x18] sm:$0xff]
          %v1004 = vld [vmem:[%s999 + $0x20] sm:$0xff]
          %v1005 = vld [vmem:[%s999 + $0x28] sm:$0xff]
          %v1006 = vld [vmem:[%s999 + $0x30] sm:$0xff]
          %v1007 = vld [vmem:[%s999 + $0x38] sm:$0xff]
          %v1024 = vunpack.c.l.b16 %v979
          %v1025 = vunpack.c.l.b16 %v980
          %v1026 = vunpack.c.l.b16 %v981
          %v1027 = vunpack.c.l.b16 %v982
          %v1028 = vunpack.c.l.b16 %v983
          %v1029 = vunpack.c.l.b16 %v984
          %v1030 = vunpack.c.l.b16 %v985
          %v1031 = vunpack.c.l.b16 %v986
          %v1032 = vunpack.c.l.b16 %v987
          %v1033 = vunpack.c.l.b16 %v988
          %v1034 = vunpack.c.l.b16 %v989
          %v1035 = vunpack.c.l.b16 %v990
          %v1036 = vunpack.c.l.b16 %v991
          %v1037 = vunpack.c.l.b16 %v992
          %v1038 = vunpack.c.l.b16 %v993
          %v1039 = vunpack.c.l.b16 %v994
          %v1040 = vpack.c.b16 %v1025, %v1024
          %v1041 = vpack.c.b16 %v1027, %v1026
          %v1042 = vpack.c.b16 %v1029, %v1028
          %v1043 = vpack.c.b16 %v1031, %v1030
          %v1044 = vpack.c.b16 %v1033, %v1032
          %v1045 = vpack.c.b16 %v1035, %v1034
          %v1046 = vpack.c.b16 %v1037, %v1036
          %v1047 = vpack.c.b16 %v1039, %v1038
          %1056 = vmatprep.subr.bf16.mxu0 0
          %1057 = vmatpush1.bf16.msra.mxu0 %v1040
          %1058 = vmatprep.subr.bf16.mxu0 0
          %1059 = vmatpush1.bf16.msra.mxu0 %v1041
          %1060 = vmatprep.subr.bf16.mxu0 0
          %1061 = vmatpush1.bf16.msra.mxu0 %v1042
          %1062 = vmatprep.subr.bf16.mxu0 0
          %1063 = vmatpush1.bf16.msra.mxu0 %v1043
          %1064 = vmatprep.subr.bf16.mxu0 0
          %1065 = vmatpush1.bf16.msra.mxu0 %v1044
          %1066 = vmatprep.subr.bf16.mxu0 0
          %1067 = vmatpush1.bf16.msra.mxu0 %v1045
          %1068 = vmatprep.subr.bf16.mxu0 0
          %1069 = vmatpush1.bf16.msra.mxu0 %v1046
          %1070 = vmatprep.subr.bf16.mxu0 0
          %1071 = vmatpush1.bf16.msra.mxu0 %v1047
          %1072 = vmatprep.subr.bf16.mxu0 0
          %1073 = vmatpush1.bf16.msra.mxu0 0
          %1074 = vmatprep.subr.bf16.mxu0 0
          %1075 = vmatpush1.bf16.msra.mxu0 0
          %1076 = vmatprep.subr.bf16.mxu0 0
          %1077 = vmatpush1.bf16.msra.mxu0 0
          %1078 = vmatprep.subr.bf16.mxu0 0
          %1079 = vmatpush1.bf16.msra.mxu0 0
          %1080 = vmatprep.subr.bf16.mxu0 0
          %1081 = vmatpush1.bf16.msra.mxu0 0
          %1082 = vmatprep.subr.bf16.mxu0 0
          %1083 = vmatpush1.bf16.msra.mxu0 0
          %1084 = vmatprep.subr.bf16.mxu0 0
          %1085 = vmatpush1.bf16.msra.mxu0 0
          %1086 = vmatprep.subr.bf16.mxu0 0
          %1087 = vmatpush1.bf16.msra.mxu0 0
          %1088 = vmatprep.mubr.bf16.mxu0 0
          %1089 = vmatmul.mubr.bf16.gmra.mrb[0].mxu0 %v1000
          %v1090 = vpop.f32.mrb[0].mxu0
          %v1091 = vadd.f32 0.0, %v1090
          %v1092 = vpop.f32.mrb[0].mxu0
          %v1093 = vpop.f32.mrb[0].mxu0
          %v1094 = vadd.f32 0.0, %v1093
          %v1095 = vpop.f32.mrb[0].mxu0
          %1096 = vmatprep.mubr.bf16.mxu0 0
          %1097 = vmatmul.mubr.bf16.gmra.mrb[0].mxu0 %v1001
          %v1098 = vpop.f32.mrb[0].mxu0
          %v1099 = vadd.f32 0.0, %v1098
          %v1100 = vpop.f32.mrb[0].mxu0
          %v1101 = vpop.f32.mrb[0].mxu0
          %v1102 = vadd.f32 0.0, %v1101
          %v1103 = vpop.f32.mrb[0].mxu0
          %1104 = vmatprep.mubr.bf16.mxu0 0
          %1105 = vmatmul.mubr.bf16.gmra.mrb[0].mxu0 %v1002
          %v1106 = vpop.f32.mrb[0].mxu0
          %v1107 = vadd.f32 0.0, %v1106
          %v1108 = vpop.f32.mrb[0].mxu0
          %v1109 = vpop.f32.mrb[0].mxu0
          %v1110 = vadd.f32 0.0, %v1109
          %v1111 = vpop.f32.mrb[0].mxu0
          %1112 = vmatprep.mubr.bf16.mxu0 0
          %1113 = vmatmul.mubr.bf16.gmra.mrb[0].mxu0 %v1003
          %v1114 = vpop.f32.mrb[0].mxu0
          %v1115 = vadd.f32 0.0, %v1114
          %v1116 = vpop.f32.mrb[0].mxu0
          %v1117 = vpop.f32.mrb[0].mxu0
          %v1118 = vadd.f32 0.0, %v1117
          %v1119 = vpop.f32.mrb[0].mxu0
          %1120 = vmatprep.mubr.bf16.mxu0 0
          %1121 = vmatmul.mubr.bf16.gmra.mrb[0].mxu0 %v1004
          %v1122 = vpop.f32.mrb[0].mxu0
          %v1123 = vadd.f32 0.0, %v1122
          %v1124 = vpop.f32.mrb[0].mxu0
          %v1125 = vpop.f32.mrb[0].mxu0
          %v1126 = vadd.f32 0.0, %v1125
          %v1127 = vpop.f32.mrb[0].mxu0
          %1128 = vmatprep.mubr.bf16.mxu0 0
          %1129 = vmatmul.mubr.bf16.gmra.mrb[0].mxu0 %v1005
          %v1130 = vpop.f32.mrb[0].mxu0
          %v1131 = vadd.f32 0.0, %v1130
          %v1132 = vpop.f32.mrb[0].mxu0
          %v1133 = vpop.f32.mrb[0].mxu0
          %v1134 = vadd.f32 0.0, %v1133
          %v1135 = vpop.f32.mrb[0].mxu0
          %1136 = vmatprep.mubr.bf16.mxu0 0
          %1137 = vmatmul.mubr.bf16.gmra.mrb[0].mxu0 %v1006
          %v1138 = vpop.f32.mrb[0].mxu0
          %v1139 = vadd.f32 0.0, %v1138
          %v1140 = vpop.f32.mrb[0].mxu0
          %v1141 = vpop.f32.mrb[0].mxu0
          %v1142 = vadd.f32 0.0, %v1141
          %v1143 = vpop.f32.mrb[0].mxu0
          %1144 = vmatprep.mubr.bf16.mxu0 0
          %1145 = vmatmul.mubr.bf16.gmra.mrb[0].mxu0 %v1007
          %v1146 = vpop.f32.mrb[0].mxu0
          %v1147 = vadd.f32 0.0, %v1146
          %v1148 = vpop.f32.mrb[0].mxu0
          %v1149 = vpop.f32.mrb[0].mxu0
          %v1150 = vadd.f32 0.0, %v1149
          %v1151 = vpop.f32.mrb[0].mxu0
          %1152 = vdwg.mxu0
          %v1153 = vld [vmem:[#allocation4] sm:$0xff]
          %v1154 = vld [vmem:[#allocation4 + $0x8] sm:$0xff]
          %v1155 = vld [vmem:[#allocation4 + $0x10] sm:$0xff]
          %v1156 = vld [vmem:[#allocation4 + $0x18] sm:$0xff]
          %v1157 = vld [vmem:[#allocation4 + $0x20] sm:$0xff]
          %v1158 = vld [vmem:[#allocation4 + $0x28] sm:$0xff]
          %v1159 = vld [vmem:[#allocation4 + $0x30] sm:$0xff]
          %v1160 = vld [vmem:[#allocation4 + $0x38] sm:$0xff]
          %v1161 = vld [vmem:[#allocation4 + $0x40] sm:$0xff]
          %v1162 = vld [vmem:[#allocation4 + $0x48] sm:$0xff]
          %v1163 = vld [vmem:[#allocation4 + $0x50] sm:$0xff]
          %v1164 = vld [vmem:[#allocation4 + $0x58] sm:$0xff]
          %v1165 = vld [vmem:[#allocation4 + $0x60] sm:$0xff]
          %v1166 = vld [vmem:[#allocation4 + $0x68] sm:$0xff]
          %v1167 = vld [vmem:[#allocation4 + $0x70] sm:$0xff]
          %v1168 = vld [vmem:[#allocation4 + $0x78] sm:$0xff]
          %s1169 = smul.u32 %s34, 8
          %s1170 = smul.addr %s1169, 8
          %s1171 = scalar_lea.vmem [#allocation2], %s1170
          %v1172 = vld [vmem:[%s1171] sm:$0xff]
          %v1173 = vld [vmem:[%s1171 + $0x8] sm:$0xff]
          %v1174 = vld [vmem:[%s1171 + $0x10] sm:$0xff]
          %v1175 = vld [vmem:[%s1171 + $0x18] sm:$0xff]
          %v1176 = vld [vmem:[%s1171 + $0x20] sm:$0xff]
          %v1177 = vld [vmem:[%s1171 + $0x28] sm:$0xff]
          %v1178 = vld [vmem:[%s1171 + $0x30] sm:$0xff]
          %v1179 = vld [vmem:[%s1171 + $0x38] sm:$0xff]
          %v1180 = vpack.c.bf16 %v1094, %v1091
          %v1181 = vpack.c.bf16 %v1102, %v1099
          %v1182 = vpack.c.bf16 %v1110, %v1107
          %v1183 = vpack.c.bf16 %v1118, %v1115
          %v1184 = vpack.c.bf16 %v1126, %v1123
          %v1185 = vpack.c.bf16 %v1134, %v1131
          %v1186 = vpack.c.bf16 %v1142, %v1139
          %v1187 = vpack.c.bf16 %v1150, %v1147
          %1188 = vmatprep.subr.bf16.mxu0 0
          %1189 = vmatpush1.bf16.msra.mxu0 %v1180
          %1190 = vmatprep.subr.bf16.mxu0 0
          %1191 = vmatpush1.bf16.msra.mxu0 %v1181
          %1192 = vmatprep.subr.bf16.mxu0 0
          %1193 = vmatpush1.bf16.msra.mxu0 %v1182
          %1194 = vmatprep.subr.bf16.mxu0 0
          %1195 = vmatpush1.bf16.msra.mxu0 %v1183
          %1196 = vmatprep.subr.bf16.mxu0 0
          %1197 = vmatpush1.bf16.msra.mxu0 %v1184
          %1198 = vmatprep.subr.bf16.mxu0 0
          %1199 = vmatpush1.bf16.msra.mxu0 %v1185
          %1200 = vmatprep.subr.bf16.mxu0 0
          %1201 = vmatpush1.bf16.msra.mxu0 %v1186
          %1202 = vmatprep.subr.bf16.mxu0 0
          %1203 = vmatpush1.bf16.msra.mxu0 %v1187
          %1204 = vmatprep.subr.bf16.mxu0 0
          %1205 = vmatpush1.bf16.msra.mxu0 0
          %1206 = vmatprep.subr.bf16.mxu0 0
          %1207 = vmatpush1.bf16.msra.mxu0 0
          %1208 = vmatprep.subr.bf16.mxu0 0
          %1209 = vmatpush1.bf16.msra.mxu0 0
          %1210 = vmatprep.subr.bf16.mxu0 0
          %1211 = vmatpush1.bf16.msra.mxu0 0
          %1212 = vmatprep.subr.bf16.mxu0 0
          %1213 = vmatpush1.bf16.msra.mxu0 0
          %1214 = vmatprep.subr.bf16.mxu0 0
          %1215 = vmatpush1.bf16.msra.mxu0 0
          %1216 = vmatprep.subr.bf16.mxu0 0
          %1217 = vmatpush1.bf16.msra.mxu0 0
          %1218 = vmatprep.subr.bf16.mxu0 0
          %1219 = vmatpush1.bf16.msra.mxu0 0
          %1220 = vmatprep.mubr.bf16.mxu0 0
          %1221 = vmatmul.mubr.bf16.gmra.mrb[0].mxu0 %v1172
          %v1222 = vpop.f32.mrb[0].mxu0
          %v1223 = vadd.f32 0.0, %v1222
          %v1224 = vpop.f32.mrb[0].mxu0
          %v1225 = vpop.f32.mrb[0].mxu0
          %v1226 = vadd.f32 0.0, %v1225
          %v1227 = vpop.f32.mrb[0].mxu0
          %1228 = vmatprep.mubr.bf16.mxu0 0
          %1229 = vmatmul.mubr.bf16.gmra.mrb[0].mxu0 %v1173
          %v1230 = vpop.f32.mrb[0].mxu0
          %v1231 = vadd.f32 0.0, %v1230
          %v1232 = vpop.f32.mrb[0].mxu0
          %v1233 = vpop.f32.mrb[0].mxu0
          %v1234 = vadd.f32 0.0, %v1233
          %v1235 = vpop.f32.mrb[0].mxu0
          %1236 = vmatprep.mubr.bf16.mxu0 0
          %1237 = vmatmul.mubr.bf16.gmra.mrb[0].mxu0 %v1174
          %v1238 = vpop.f32.mrb[0].mxu0
          %v1239 = vadd.f32 0.0, %v1238
          %v1240 = vpop.f32.mrb[0].mxu0
          %v1241 = vpop.f32.mrb[0].mxu0
          %v1242 = vadd.f32 0.0, %v1241
          %v1243 = vpop.f32.mrb[0].mxu0
          %1244 = vmatprep.mubr.bf16.mxu0 0
          %1245 = vmatmul.mubr.bf16.gmra.mrb[0].mxu0 %v1175
          %v1246 = vpop.f32.mrb[0].mxu0
          %v1247 = vadd.f32 0.0, %v1246
          %v1248 = vpop.f32.mrb[0].mxu0
          %v1249 = vpop.f32.mrb[0].mxu0
          %v1250 = vadd.f32 0.0, %v1249
          %v1251 = vpop.f32.mrb[0].mxu0
          %1252 = vmatprep.mubr.bf16.mxu0 0
          %1253 = vmatmul.mubr.bf16.gmra.mrb[0].mxu0 %v1176
          %v1254 = vpop.f32.mrb[0].mxu0
          %v1255 = vadd.f32 0.0, %v1254
          %v1256 = vpop.f32.mrb[0].mxu0
          %v1257 = vpop.f32.mrb[0].mxu0
          %v1258 = vadd.f32 0.0, %v1257
          %v1259 = vpop.f32.mrb[0].mxu0
          %1260 = vmatprep.mubr.bf16.mxu0 0
          %1261 = vmatmul.mubr.bf16.gmra.mrb[0].mxu0 %v1177
          %v1262 = vpop.f32.mrb[0].mxu0
          %v1263 = vadd.f32 0.0, %v1262
          %v1264 = vpop.f32.mrb[0].mxu0
          %v1265 = vpop.f32.mrb[0].mxu0
          %v1266 = vadd.f32 0.0, %v1265
          %v1267 = vpop.f32.mrb[0].mxu0
          %1268 = vmatprep.mubr.bf16.mxu0 0
          %1269 = vmatmul.mubr.bf16.gmra.mrb[0].mxu0 %v1178
          %v1270 = vpop.f32.mrb[0].mxu0
          %v1271 = vadd.f32 0.0, %v1270
          %v1272 = vpop.f32.mrb[0].mxu0
          %v1273 = vpop.f32.mrb[0].mxu0
          %v1274 = vadd.f32 0.0, %v1273
          %v1275 = vpop.f32.mrb[0].mxu0
          %1276 = vmatprep.mubr.bf16.mxu0 0
          %1277 = vmatmul.mubr.bf16.gmra.mrb[0].mxu0 %v1179
          %v1278 = vpop.f32.mrb[0].mxu0
          %v1279 = vadd.f32 0.0, %v1278
          %v1280 = vpop.f32.mrb[0].mxu0
          %v1281 = vpop.f32.mrb[0].mxu0
          %v1282 = vadd.f32 0.0, %v1281
          %v1283 = vpop.f32.mrb[0].mxu0
          %1284 = vdwg.mxu0
          %v1285 = vadd.f32 %v1153, %v1223
          %v1286 = vadd.f32 %v1154, %v1226
          %v1287 = vadd.f32 %v1155, %v1231
          %v1288 = vadd.f32 %v1156, %v1234
          %v1289 = vadd.f32 %v1157, %v1239
          %v1290 = vadd.f32 %v1158, %v1242
          %v1291 = vadd.f32 %v1159, %v1247
          %v1292 = vadd.f32 %v1160, %v1250
          %v1293 = vadd.f32 %v1161, %v1255
          %v1294 = vadd.f32 %v1162, %v1258
          %v1295 = vadd.f32 %v1163, %v1263
          %v1296 = vadd.f32 %v1164, %v1266
          %v1297 = vadd.f32 %v1165, %v1271
          %v1298 = vadd.f32 %v1166, %v1274
          %v1299 = vadd.f32 %v1167, %v1279
          %v1300 = vadd.f32 %v1168, %v1282
          %1301 = vst [vmem:[#allocation4] sm:$0xff] %v1285
          %1302 = vst [vmem:[#allocation4 + $0x8] sm:$0xff] %v1286
          %1303 = vst [vmem:[#allocation4 + $0x10] sm:$0xff] %v1287
          %1304 = vst [vmem:[#allocation4 + $0x18] sm:$0xff] %v1288
          %1305 = vst [vmem:[#allocation4 + $0x20] sm:$0xff] %v1289
          %1306 = vst [vmem:[#allocation4 + $0x28] sm:$0xff] %v1290
          %1307 = vst [vmem:[#allocation4 + $0x30] sm:$0xff] %v1291
          %1308 = vst [vmem:[#allocation4 + $0x38] sm:$0xff] %v1292
          %1309 = vst [vmem:[#allocation4 + $0x40] sm:$0xff] %v1293
          %1310 = vst [vmem:[#allocation4 + $0x48] sm:$0xff] %v1294
          %1311 = vst [vmem:[#allocation4 + $0x50] sm:$0xff] %v1295
          %1312 = vst [vmem:[#allocation4 + $0x58] sm:$0xff] %v1296
          %1313 = vst [vmem:[#allocation4 + $0x60] sm:$0xff] %v1297
          %1314 = vst [vmem:[#allocation4 + $0x68] sm:$0xff] %v1298
          %1315 = vst [vmem:[#allocation4 + $0x70] sm:$0xff] %v1299
          %1316 = vst [vmem:[#allocation4 + $0x78] sm:$0xff] %v1300
        $region96: #{gcn_weighted_forward.1} parent=51 // pred_fallthru
          _
        // Predicated region
        $region97: #{gcn_weighted_forward.1} parent=51 // pred_check
          %p1317 = pneg %p462
        $region98: #{gcn_weighted_forward.1} parent=51 // pred_check_branch
          %1319 = sbr.rel (%p1317) target = $region100
        $region99: #{gcn_weighted_forward.1} parent=51 // pred_region
          %v1320 = vld [vmem:[#allocation11] sm:$0x1]
          %p1321 = scmp.eq.s32.totalorder %s33, 1
          %v1322 = vld [vmem:[#allocation14] sm:$0x1]
          %v1323 = vld [vmem:[#allocation17] sm:$0x1]
          %s1324 = scalar_select %p1321, 1, 0
          %v1325 = vstv %s1324
          %vm1326 = vcmp.eq.s32.totalorder %v1325, 1
          %v1327 = vsel %vm1326, %v1322, %v1323
          %s1328 = scalar_select %p482, 1, 0
          %v1329 = vstv %s1328
          %vm1330 = vcmp.eq.s32.totalorder %v1329, 1
          %v1331 = vsel %vm1330, %v1320, %v1327
          %v1332 = vld [vmem:[#allocation4] sm:$0xff]
          %v1333 = vld [vmem:[#allocation4 + $0x8] sm:$0xff]
          %v1334 = vld [vmem:[#allocation4 + $0x10] sm:$0xff]
          %v1335 = vld [vmem:[#allocation4 + $0x18] sm:$0xff]
          %v1336 = vld [vmem:[#allocation4 + $0x20] sm:$0xff]
          %v1337 = vld [vmem:[#allocation4 + $0x28] sm:$0xff]
          %v1338 = vld [vmem:[#allocation4 + $0x30] sm:$0xff]
          %v1339 = vld [vmem:[#allocation4 + $0x38] sm:$0xff]
          %v1340 = vld [vmem:[#allocation4 + $0x40] sm:$0xff]
          %v1341 = vld [vmem:[#allocation4 + $0x48] sm:$0xff]
          %v1342 = vld [vmem:[#allocation4 + $0x50] sm:$0xff]
          %v1343 = vld [vmem:[#allocation4 + $0x58] sm:$0xff]
          %v1344 = vld [vmem:[#allocation4 + $0x60] sm:$0xff]
          %v1345 = vld [vmem:[#allocation4 + $0x68] sm:$0xff]
          %v1346 = vld [vmem:[#allocation4 + $0x70] sm:$0xff]
          %v1347 = vld [vmem:[#allocation4 + $0x78] sm:$0xff]
          %v1349 = vlaneseq
          %v1350 = vshrl.u32 %v1349, 7
          %v1351 = vsub.s32 0, %v1350
          %v1352 = vrot.slane %v1331, %v1351
          %v1354 = vadd.f32 %v1332, %v1352
          %v1355 = vadd.f32 %v1333, %v1352
          %v1356 = vadd.f32 %v1334, %v1352
          %v1357 = vadd.f32 %v1335, %v1352
          %v1358 = vadd.f32 %v1336, %v1352
          %v1359 = vadd.f32 %v1337, %v1352
          %v1360 = vadd.f32 %v1338, %v1352
          %v1361 = vadd.f32 %v1339, %v1352
          %v1362 = vadd.f32 %v1340, %v1352
          %v1363 = vadd.f32 %v1341, %v1352
          %v1364 = vadd.f32 %v1342, %v1352
          %v1365 = vadd.f32 %v1343, %v1352
          %v1366 = vadd.f32 %v1344, %v1352
          %v1367 = vadd.f32 %v1345, %v1352
          %v1368 = vadd.f32 %v1346, %v1352
          %v1369 = vadd.f32 %v1347, %v1352
          %p1370 = scmp.lt.s32.totalorder %s33, 2
          // Predicated region
          $region101: #{gcn_weighted_forward.1} parent=99 // pred_check
            %p1371 = pneg %p1370
          $region102: #{gcn_weighted_forward.1} parent=99 // pred_check_branch
            %1373 = sbr.rel (%p1371) target = $region104
          $region103: #{gcn_weighted_forward.1} parent=99 // pred_region
            %v1374 = vmax.f32 %v1354, 0.0
            %v1375 = vmax.f32 %v1355, 0.0
            %v1376 = vmax.f32 %v1356, 0.0
            %v1377 = vmax.f32 %v1357, 0.0
            %v1378 = vmax.f32 %v1358, 0.0
            %v1379 = vmax.f32 %v1359, 0.0
            %v1380 = vmax.f32 %v1360, 0.0
            %v1381 = vmax.f32 %v1361, 0.0
            %v1382 = vmax.f32 %v1362, 0.0
            %v1383 = vmax.f32 %v1363, 0.0
            %v1384 = vmax.f32 %v1364, 0.0
            %v1385 = vmax.f32 %v1365, 0.0
            %v1386 = vmax.f32 %v1366, 0.0
            %v1387 = vmax.f32 %v1367, 0.0
            %v1388 = vmax.f32 %v1368, 0.0
            %v1389 = vmax.f32 %v1369, 0.0
            %v1390 = vpack.c.bf16 %v1375, %v1374
            %v1391 = vpack.c.bf16 %v1377, %v1376
            %v1392 = vpack.c.bf16 %v1379, %v1378
            %v1393 = vpack.c.bf16 %v1381, %v1380
            %v1394 = vpack.c.bf16 %v1383, %v1382
            %v1395 = vpack.c.bf16 %v1385, %v1384
            %v1396 = vpack.c.bf16 %v1387, %v1386
            %v1397 = vpack.c.bf16 %v1389, %v1388
            %1398 = vst [vmem:[#allocation3] sm:$0xff] %v1390
            %1399 = vst [vmem:[#allocation3 + $0x8] sm:$0xff] %v1391
            %1400 = vst [vmem:[#allocation3 + $0x10] sm:$0xff] %v1392
            %1401 = vst [vmem:[#allocation3 + $0x18] sm:$0xff] %v1393
            %1402 = vst [vmem:[#allocation3 + $0x20] sm:$0xff] %v1394
            %1403 = vst [vmem:[#allocation3 + $0x28] sm:$0xff] %v1395
            %1404 = vst [vmem:[#allocation3 + $0x30] sm:$0xff] %v1396
            %1405 = vst [vmem:[#allocation3 + $0x38] sm:$0xff] %v1397
          $region104: #{gcn_weighted_forward.1} parent=99 // pred_fallthru
            _
          %p1406 = scmp.eq.s32.totalorder %s33, 2
          // Predicated region
          $region105: #{gcn_weighted_forward.1} parent=99 // pred_check
            %p1407 = pneg %p1406
          $region106: #{gcn_weighted_forward.1} parent=99 // pred_check_branch
            %1409 = sbr.rel (%p1407) target = $region108
          $region107: #{gcn_weighted_forward.1} parent=99 // pred_region
            %1410 = vst [vmem:[#allocation19] sm:$0xff] %v1354
            %1411 = vst [vmem:[#allocation19 + $0x8] sm:$0xff] %v1355
            %1412 = vst [vmem:[#allocation19 + $0x10] sm:$0xff] %v1356
            %1413 = vst [vmem:[#allocation19 + $0x18] sm:$0xff] %v1357
            %1414 = vst [vmem:[#allocation19 + $0x20] sm:$0xff] %v1358
            %1415 = vst [vmem:[#allocation19 + $0x28] sm:$0xff] %v1359
            %1416 = vst [vmem:[#allocation19 + $0x30] sm:$0xff] %v1360
            %1417 = vst [vmem:[#allocation19 + $0x38] sm:$0xff] %v1361
            %1418 = vst [vmem:[#allocation19 + $0x40] sm:$0xff] %v1362
            %1419 = vst [vmem:[#allocation19 + $0x48] sm:$0xff] %v1363
            %1420 = vst [vmem:[#allocation19 + $0x50] sm:$0xff] %v1364
            %1421 = vst [vmem:[#allocation19 + $0x58] sm:$0xff] %v1365
            %1422 = vst [vmem:[#allocation19 + $0x60] sm:$0xff] %v1366
            %1423 = vst [vmem:[#allocation19 + $0x68] sm:$0xff] %v1367
            %1424 = vst [vmem:[#allocation19 + $0x70] sm:$0xff] %v1368
            %1425 = vst [vmem:[#allocation19 + $0x78] sm:$0xff] %v1369
          $region108: #{gcn_weighted_forward.1} parent=99 // pred_fallthru
            _
        $region100: #{gcn_weighted_forward.1} parent=51 // pred_fallthru
          _
        // Predicated region
        $region109: #{gcn_weighted_forward.1} parent=51 // pred_check
          %p1426 = pneg %p240
        $region110: #{gcn_weighted_forward.1} parent=51 // pred_check_branch
          %1428 = sbr.rel (%p1426) target = $region112
        $region111: #{gcn_weighted_forward.1} parent=51 // pred_region
          %s1430 = ssub.s32 2048, 2048
          %1431 = vsyncadd [#allocation7], %s1430
          %s1432 = sshll.u32 [#allocation19], 4
          %s1433 = int_to_ptr.vmem [resolvable:$true] %s1432
          %1438 = dma.vmem_to_hbm [thread:$0]  %s1433, 2048, %s8, [#allocation7], 128, 128, 8
        $region112: #{gcn_weighted_forward.1} parent=51 // pred_fallthru
          _
        // Predicated region
        $region113: #{gcn_weighted_forward.1} parent=51 // pred_check
          %p1439 = pneg %p240
        $region114: #{gcn_weighted_forward.1} parent=51 // pred_check_branch
          %1441 = sbr.rel (%p1439) target = $region116
        $region115: #{gcn_weighted_forward.1} parent=51 // pred_region
          %1442 = dma.done [#allocation7], 2048
        $region116: #{gcn_weighted_forward.1} parent=51 // pred_fallthru
          _
      $region52: #{gcn_weighted_forward.1} parent=5 // pred_fallthru
        _
      %p1443 = scmp.le.s32.totalorder 2, %s24
      // Predicated region
      $region117: #{gcn_weighted_forward.1} parent=5 // pred_check
        %p1444 = pneg %p1443
      $region118: #{gcn_weighted_forward.1} parent=5 // pred_check_branch
        %1446 = sbr.rel (%p1444) target = $region120
      $region119: #{gcn_weighted_forward.1} parent=5 // pred_region
        %s1447 = ssub.s32 %s24, 2
      $region120: #{gcn_weighted_forward.1} parent=5 // pred_fallthru
        _
    $region6: #{gcn_weighted_forward.1} parent=1 // loop_footer
      %s28 = sadd.s32 1, %s24
    $region7: #{gcn_weighted_forward.1} parent=1 // loop_footer_branch
      %23 = sbr.rel target = $region3
    $region8: #{gcn_weighted_forward.1} parent=1 // loop_exit
      _
    %1448 = vsyncpa [#allocation6], 1
    %s1449 = scalar_lea.sflag [#allocation6], 1
    %1450 = vsyncpa %s1449, 1
    %1451 = vsyncpa [#allocation9], 1
    %s1452 = scalar_lea.sflag [#allocation9], 1
    %1453 = vsyncpa %s1452, 1
    %1454 = vsyncpa [#allocation12], 1
    %1455 = vsyncpa [#allocation15], 1
    %1456 = vsyncpa [#allocation18], 1
    %1457 = vsyncpa [#allocation7], 1
    %s1458 = scalar_lea.sflag [#allocation7], 1
    %1459 = vsyncpa %s1458, 1

</llo_original>
